<compile_context>
chip_gen: v7x
topology: tpu7x:2x2x1
jax: 0.10.0
libtpu: 0.0.40
codegen_flags: <defaults>
</compile_context>

<pallas_src>
import functools

import numpy as np
import jax
import jax.numpy as jnp
from jax.experimental import pallas as pl
from jax.experimental.pallas import tpu as pltpu


# ----------------------------------------------------------------------------
# Kernel
# ----------------------------------------------------------------------------
def down_tree_lstm_kernel(parent_ref,                                  # SMEM
                          xg_ref, wx_ref, bx_ref, wh_ref, bh_ref,      # VMEM in
                          tml_ref, tmv_ref,                            # VMEM in
                          state_ref,                                   # VMEM out [c|h]
                          gx_scr, pbuf,                                # VMEM scratch
                          *, num_levels, w_max, mp, num_slots):
    # --- zero the sentinel parent rows (roots / level padding read these) ---
    state_ref[pl.ds(num_slots, 8), :] = jnp.zeros((8, 2 * mp), jnp.float32)

    # --- recursion-independent input projection: one batched MXU matmul ------
    gx_scr[...] = (jnp.dot(xg_ref[...], wx_ref[...],
                           preferred_element_type=jnp.float32) + bx_ref[...])

    # --- hoisted loop-invariant loads ---------------------------------------
    wh = wh_ref[...]
    bh = bh_ref[...]
    sig_w = 6 * mp  # sigmoid gates [i_vis, o_vis, f_vis, i_lang, o_lang, f_lang]

    def level_body(l, carry):
        off = pl.multiple_of(l * w_max, 8)

        # gather this level's packed parent [c|h] rows (one copy per node)
        def gather_one(j, c):
            pp = parent_ref[off + j]                      # sentinel for roots
            pbuf[pl.ds(j, 1), :] = state_ref[pl.ds(pp, 1), :]
            return c
        jax.lax.fori_loop(0, w_max, gather_one, 0, unroll=True)

        pstate = pbuf[...]
        parent_c = pstate[:, :mp]
        parent_h = pstate[:, mp:]

        # recurrent projection for the whole level: (W, Mp) x (Mp, 8*Mp)
        gh = jnp.dot(parent_h, wh, preferred_element_type=jnp.float32) + bh
        s = gx_scr[pl.ds(off, w_max), :] + gh

        # two full-width, lane-aligned activations
        sig = jax.nn.sigmoid(s[:, :sig_w])
        th = jnp.tanh(s[:, sig_w:])

        i_vis, o_vis, f_vis = sig[:, 0:mp], sig[:, mp:2 * mp], sig[:, 2 * mp:3 * mp]
        i_lang = sig[:, 3 * mp:4 * mp]
        o_lang = sig[:, 4 * mp:5 * mp]
        f_lang = sig[:, 5 * mp:6 * mp]
        u_vis, u_lang = th[:, 0:mp], th[:, mp:2 * mp]

        c_vis = i_vis * u_vis + f_vis * parent_c
        h_vis = o_vis * jnp.tanh(c_vis)
        c_lang = i_lang * u_lang + f_lang * parent_c
        h_lang = o_lang * jnp.tanh(c_lang)

        # type_mask mixing: h = tm_lang*h_lang + tm_vis*h_vis (broadcast (W,1))
        tm_l = tml_ref[pl.ds(off, w_max), :]
        tm_v = tmv_ref[pl.ds(off, w_max), :]
        c = tm_l * c_lang + tm_v * c_vis
        h = tm_l * h_lang + tm_v * h_vis
        # TODO(synk): nn.Dropout() is treated as identity (eval-mode semantics).

        # single packed write per node; the output doubles as recurrent state
        state_ref[pl.ds(off, w_max), :] = jnp.concatenate([c, h], axis=-1)
        return carry

    jax.lax.fori_loop(0, num_levels, level_body, 0)


# ----------------------------------------------------------------------------
# Host-side level (wavefront) schedule.  Nodes are assumed in topological order
# (parent before child); parent index -1 == root.
# ----------------------------------------------------------------------------
def build_level_schedule(node_word_idx, node_parent, node_type):
    parent = np.asarray(node_parent)
    widx = np.asarray(node_word_idx)
    ntype = np.asarray(node_type, dtype=np.float32)
    n = parent.shape[0]

    level = np.zeros(n, np.int32)
    for i in range(n):
        p = int(parent[i])
        level[i] = 0 if p < 0 else level[p] + 1
    num_levels = int(level.max()) + 1
    levels = [[] for _ in range(num_levels)]
    for i in range(n):
        levels[int(level[i])].append(i)

    w_max = max(len(lv) for lv in levels)
    w_max = ((w_max + 7) // 8) * 8           # sublane-aligned level width
    num_slots = num_levels * w_max
    sentinel = num_slots                      # index of the zero parent row

    slot_parent = np.full((num_slots,), sentinel, np.int32)
    slot_word = np.zeros((num_slots,), np.int32)
    slot_tml = np.zeros((num_slots, 1), np.float32)
    slot_tmv = np.zeros((num_slots, 1), np.float32)
    node_slot = np.zeros((n,), np.int32)

    for l, nodes in enumerate(levels):
        for j, nd in enumerate(nodes):
            s = l * w_max + j
            node_slot[nd] = s
            slot_word[s] = widx[nd]
            p = int(parent[nd])
            slot_parent[s] = sentinel if p < 0 else int(node_slot[p])
            slot_tml[s, 0] = ntype[nd, 0]
            slot_tmv[s, 0] = ntype[nd, 1]

    return (jnp.asarray(slot_parent), jnp.asarray(slot_word),
            jnp.asarray(slot_tml), jnp.asarray(slot_tmv),
            jnp.asarray(node_slot), num_levels, w_max, num_slots)


# ----------------------------------------------------------------------------
# Wrapper
# ----------------------------------------------------------------------------
def down_tree_lstm(x, wx, bx, wh, bh, node_word_idx, node_parent, node_type,
                   mem_dim):
    mp = wh.shape[0]                          # padded mem_dim (multiple of 128)
    (slot_parent, slot_word, slot_tml, slot_tmv,
     node_slot, num_levels, w_max, num_slots) = build_level_schedule(
        node_word_idx, node_parent, node_type)

    # recursion-independent word gather done once in the wrapper
    xg = jnp.take(x, slot_word, axis=0)       # (num_slots, in_dim)

    kernel = functools.partial(down_tree_lstm_kernel,
                               num_levels=num_levels, w_max=w_max,
                               mp=mp, num_slots=num_slots)

    smem = pl.BlockSpec(memory_space=pltpu.MemorySpace.SMEM)
    vmem = pl.BlockSpec(memory_space=pltpu.MemorySpace.VMEM)

    out_rows = num_slots + 8                  # +8 sentinel (zero) parent rows
    out_shape = jax.ShapeDtypeStruct((out_rows, 2 * mp), jnp.float32)

    f32 = 4
    vmem_bytes = f32 * (xg.size + wx.size + bx.size + wh.size + bh.size
                        + slot_tml.size + slot_tmv.size
                        + out_rows * 2 * mp
                        + num_slots * 8 * mp + w_max * 2 * mp)
    vmem_limit = int(min(max(2 * vmem_bytes + (4 << 20), 16 << 20), 48 << 20))

    state = pl.pallas_call(
        kernel,
        out_shape=out_shape,
        in_specs=[smem, vmem, vmem, vmem, vmem, vmem, vmem, vmem],
        out_specs=vmem,
        scratch_shapes=[pltpu.VMEM((num_slots, 8 * mp), jnp.float32),   # gx_scr
                        pltpu.VMEM((w_max, 2 * mp), jnp.float32)],      # pbuf
        compiler_params=pltpu.CompilerParams(vmem_limit_bytes=vmem_limit),
    )(slot_parent, xg, wx, bx, wh, bh, slot_tml, slot_tmv)

    node_state = jnp.take(state, node_slot, axis=0)
    out_c = node_state[:, :mem_dim]
    out_h = node_state[:, mp:mp + mem_dim]
    return out_c, out_h


# ----------------------------------------------------------------------------
# Parameters: same nn.Linear shapes as the PyTorch module, packed lane-dense.
# ----------------------------------------------------------------------------
def make_params(key, in_dim, mem_dim):
    ks = jax.random.split(key, 8)
    s = 0.1

    def lin(k, out_d, in_d):
        kw, kb = jax.random.split(k)
        return (s * jax.random.normal(kw, (out_d, in_d), jnp.float32),
                s * jax.random.normal(kb, (out_d,), jnp.float32))

    p = {}
    p["ioux_vis"] = lin(ks[0], 3 * mem_dim, in_dim)
    p["iouh_vis"] = lin(ks[1], 3 * mem_dim, mem_dim)
    p["fx_vis"] = lin(ks[2], mem_dim, in_dim)
    p["fh_vis"] = lin(ks[3], mem_dim, mem_dim)
    p["ioux_lang"] = lin(ks[4], 3 * mem_dim, in_dim)
    p["iouh_lang"] = lin(ks[5], 3 * mem_dim, mem_dim)
    p["fx_lang"] = lin(ks[6], mem_dim, in_dim)
    p["fh_lang"] = lin(ks[7], mem_dim, mem_dim)
    return p


def pack_params(p, mem_dim):
    """Pack + zero-pad to a lane-dense layout.

    Column order (each block mp wide, mp = ceil(mem_dim/128)*128):
      [i_vis, o_vis, f_vis, i_lang, o_lang, f_lang, u_vis, u_lang]
    (sigmoid gates contiguous first, tanh gates contiguous last).
    Wh rows beyond mem_dim are zero so padded h columns never leak.
    """
    M = mem_dim
    mp = ((M + 127) // 128) * 128

    def padc(w):   # (K, M) -> (K, mp)
        return jnp.pad(w, ((0, 0), (0, mp - M)))

    def padr(w):   # (M, mp) -> (mp, mp)
        return jnp.pad(w, ((0, mp - M), (0, 0)))

    def padb(b):
        return jnp.pad(b, (0, mp - M))

    def xblocks(name):
        Wiou, biou = p["ioux_" + name]
        Wf, bf = p["fx_" + name]
        Wi, Wo, Wu = Wiou[:M].T, Wiou[M:2 * M].T, Wiou[2 * M:].T  # (in_dim, M)
        bi, bo, bu = biou[:M], biou[M:2 * M], biou[2 * M:]
        return (padc(Wi), padc(Wo), padc(Wf.T), padc(Wu),
                padb(bi), padb(bo), padb(bf), padb(bu))

    def hblocks(name):
        Wiou, biou = p["iouh_" + name]
        Wf, bf = p["fh_" + name]
        Wi, Wo, Wu = Wiou[:M].T, Wiou[M:2 * M].T, Wiou[2 * M:].T  # (M, M)
        bi, bo, bu = biou[:M], biou[M:2 * M], biou[2 * M:]
        return (padr(padc(Wi)), padr(padc(Wo)), padr(padc(Wf.T)), padr(padc(Wu)),
                padb(bi), padb(bo), padb(bf), padb(bu))

    xiv, xov, xfv, xuv, bxiv, bxov, bxfv, bxuv = xblocks("vis")
    xil, xol, xfl, xul, bxil, bxol, bxfl, bxul = xblocks("lang")
    hiv, hov, hfv, huv, bhiv, bhov, bhfv, bhuv = hblocks("vis")
    hil, hol, hfl, hul, bhil, bhol, bhfl, bhul = hblocks("lang")

    wx = jnp.concatenate([xiv, xov, xfv, xil, xol, xfl, xuv, xul], axis=1)
    bx = jnp.concatenate([bxiv, bxov, bxfv, bxil, bxol, bxfl, bxuv, bxul])[None, :]
    wh = jnp.concatenate([hiv, hov, hfv, hil, hol, hfl, huv, hul], axis=1)
    bh = jnp.concatenate([bhiv, bhov, bhfv, bhil, bhol, bhfl, bhuv, bhul])[None, :]
    return wx, bx, wh, bh, mp


# ----------------------------------------------------------------------------
# Pure-JAX reference (PyTorch forward with the recursion linearized)
# ----------------------------------------------------------------------------
def reference(x, p, node_word_idx, node_parent, node_type, mem_dim):
    def node_forward(inp, child_c, child_h, name):
        Wioux, bioux = p["ioux_" + name]
        Wiouh, biouh = p["iouh_" + name]
        Wfx, bfx = p["fx_" + name]
        Wfh, bfh = p["fh_" + name]
        child_h_sum = jnp.sum(child_h, axis=0, keepdims=True)
        iou = inp @ Wioux.T + bioux + child_h_sum @ Wiouh.T + biouh
        i, o, u = jnp.split(iou, 3, axis=1)
        i, o, u = jax.nn.sigmoid(i), jax.nn.sigmoid(o), jnp.tanh(u)
        f = jax.nn.sigmoid(child_h @ Wfh.T + bfh
                           + jnp.tile(inp @ Wfx.T + bfx, (child_h.shape[0], 1)))
        fc = f * child_c
        c = i * u + jnp.sum(fc, axis=0, keepdims=True)
        h = o * jnp.tanh(c)
        return c, h

    states, cs, hs = [], [], []
    for n in range(node_parent.shape[0]):
        par = int(node_parent[n])
        if par < 0:
            child_c = jnp.zeros((1, mem_dim), jnp.float32)
            child_h = jnp.zeros((1, mem_dim), jnp.float32)
        else:
            child_c, child_h = states[par]
        inp = x[int(node_word_idx[n])][None, :]
        c_vis, h_vis = node_forward(inp, child_c, child_h, "vis")
        c_lang, h_lang = node_forward(inp, child_c, child_h, "lang")
        tm = node_type[n][None, :]
        h = tm @ jnp.concatenate([h_lang, h_vis], axis=0)
        c = tm @ jnp.concatenate([c_lang, c_vis], axis=0)
        states.append((c, h))
        cs.append(c)
        hs.append(h)
    return jnp.concatenate(cs, axis=0), jnp.concatenate(hs, axis=0)


if __name__ == "__main__":
    in_dim, mem_dim = 32, 32
    num_words, num_nodes = 8, 5

    key = jax.random.PRNGKey(0)
    k_params, k_x, k_type = jax.random.split(key, 3)

    params = make_params(k_params, in_dim, mem_dim)
    wx, bx, wh, bh, mem_pad = pack_params(params, mem_dim)

    x = jax.random.normal(k_x, (num_words, in_dim), jnp.float32)

    # Small fixed tree in topological order (parent before child):
    #        0
    #       / \
    #      1   2
    #      |   |
    #      3   4
    node_parent = jnp.array([-1, 0, 0, 1, 2], dtype=jnp.int32)
    node_word_idx = jnp.array([3, 0, 5, 7, 2], dtype=jnp.int32)
    node_type = jax.random.uniform(k_type, (num_nodes, 2), jnp.float32)

    out_c, out_h = down_tree_lstm(x, wx, bx, wh, bh,
                                  node_word_idx, node_parent, node_type,
                                  mem_dim)
    jax.block_until_ready((out_c, out_h))

    ref_c, ref_h = reference(x, params, node_word_idx, node_parent,
                             node_type, mem_dim)

    assert jnp.allclose(out_c, ref_c, atol=1e-5, rtol=1e-5), "c mismatch"
    assert jnp.allclose(out_h, ref_h, atol=1e-5, rtol=1e-5), "h mismatch"
    print("KERNEL_OK")
</pallas_src>

<mosaic_0001>
module attributes {stable_mosaic.version = 11 : i64} {
  func.func @down_tree_lstm_kernel(%arg0: memref<24xi32, #tpu.memory_space<smem>>, %arg1: memref<24x32xf32, #tpu.memory_space<vmem>>, %arg2: memref<32x1024xf32, #tpu.memory_space<vmem>>, %arg3: memref<1x1024xf32, #tpu.memory_space<vmem>>, %arg4: memref<128x1024xf32, #tpu.memory_space<vmem>>, %arg5: memref<1x1024xf32, #tpu.memory_space<vmem>>, %arg6: memref<24x1xf32, #tpu.memory_space<vmem>>, %arg7: memref<24x1xf32, #tpu.memory_space<vmem>>, %arg8: memref<32x256xf32, #tpu.memory_space<vmem>>, %arg9: memref<24x1024xf32, #tpu.memory_space<vmem>>, %arg10: memref<8x256xf32, #tpu.memory_space<vmem>>) attributes {dimension_semantics = [], scalar_prefetch = 0 : i64, scratch_operands = 2 : i64, tpu.core_type = #tpu.core_type<tc>} {
    %cst = arith.constant 0.000000e+00 : f32
    %0 = vector.broadcast %cst : f32 to vector<8x256xf32>
    %c24 = arith.constant 24 : index
    %c0 = arith.constant 0 : index
    %1 = vector.load %arg8[%c24, %c0] : memref<32x256xf32, #tpu.memory_space<vmem>>, vector<8x256xf32>
    tpu.vector_store %arg8[%c24, %c0], %0 {strides = array<i32>} : memref<32x256xf32, #tpu.memory_space<vmem>>, vector<8x256xf32>,
    %c0_0 = arith.constant 0 : index
    %c0_1 = arith.constant 0 : index
    %2 = vector.load %arg1[%c0_0, %c0_1] : memref<24x32xf32, #tpu.memory_space<vmem>>, vector<24x32xf32>
    %c0_2 = arith.constant 0 : index
    %c0_3 = arith.constant 0 : index
    %3 = vector.load %arg2[%c0_2, %c0_3] : memref<32x1024xf32, #tpu.memory_space<vmem>>, vector<32x1024xf32>
    %cst_4 = arith.constant dense<0.000000e+00> : vector<24x1024xf32>
    %4 = tpu.matmul %2, %3, %cst_4 {dimension_numbers = #tpu.dot_dimension_numbers<[1], [0], [0], [1], [0, 0, 1, 1], [], []>} : vector<24x32xf32>, vector<32x1024xf32>, vector<24x1024xf32> -> vector<24x1024xf32>
    %c0_5 = arith.constant 0 : index
    %c0_6 = arith.constant 0 : index
    %5 = vector.load %arg3[%c0_5, %c0_6] : memref<1x1024xf32, #tpu.memory_space<vmem>>, vector<1x1024xf32>
    %6 = vector.broadcast %5 : vector<1x1024xf32> to vector<24x1024xf32>
    %7 = arith.addf %4, %6 : vector<24x1024xf32>
    %c0_7 = arith.constant 0 : index
    %c0_8 = arith.constant 0 : index
    %8 = vector.load %arg9[%c0_7, %c0_8] : memref<24x1024xf32, #tpu.memory_space<vmem>>, vector<24x1024xf32>
    tpu.vector_store %arg9[%c0_7, %c0_8], %7 {strides = array<i32>} : memref<24x1024xf32, #tpu.memory_space<vmem>>, vector<24x1024xf32>,
    %c0_9 = arith.constant 0 : index
    %c0_10 = arith.constant 0 : index
    %9 = vector.load %arg4[%c0_9, %c0_10] : memref<128x1024xf32, #tpu.memory_space<vmem>>, vector<128x1024xf32>
    %c0_11 = arith.constant 0 : index
    %c0_12 = arith.constant 0 : index
    %10 = vector.load %arg5[%c0_11, %c0_12] : memref<1x1024xf32, #tpu.memory_space<vmem>>, vector<1x1024xf32>
    %c0_i32 = arith.constant 0 : i32
    %c3_i32 = arith.constant 3 : i32
    %11 = arith.addi %c0_i32, %c3_i32 : i32
    %c1_i32 = arith.constant 1 : i32
    scf.for %arg11 = %c0_i32 to %11 step %c1_i32  : i32 {
      %c8_i32 = arith.constant 8 : i32
      %12 = arith.muli %arg11, %c8_i32 : i32
      %13 = tpu.assume_multiple %12, 8 : i32
      %c0_i32_14 = arith.constant 0 : i32
      %14 = arith.addi %13, %c0_i32_14 : i32
      %15 = arith.index_cast %14 : i32 to index
      %16 = memref.load %arg0[%15] : memref<24xi32, #tpu.memory_space<smem>>
      %17 = arith.index_cast %16 : i32 to index
      %c0_15 = arith.constant 0 : index
      %18 = vector.load %arg8[%17, %c0_15] : memref<32x256xf32, #tpu.memory_space<vmem>>, vector<1x256xf32>
      %19 = arith.index_cast %c0_i32_14 : i32 to index
      %c0_16 = arith.constant 0 : index
      %20 = vector.load %arg10[%19, %c0_16] : memref<8x256xf32, #tpu.memory_space<vmem>>, vector<1x256xf32>
      tpu.vector_store %arg10[%19, %c0_16], %18 {strides = array<i32>} : memref<8x256xf32, #tpu.memory_space<vmem>>, vector<1x256xf32>,
      %c1_i32_17 = arith.constant 1 : i32
      %21 = arith.addi %13, %c1_i32_17 : i32
      %22 = arith.index_cast %21 : i32 to index
      %23 = memref.load %arg0[%22] : memref<24xi32, #tpu.memory_space<smem>>
      %24 = arith.index_cast %23 : i32 to index
      %c0_18 = arith.constant 0 : index
      %25 = vector.load %arg8[%24, %c0_18] : memref<32x256xf32, #tpu.memory_space<vmem>>, vector<1x256xf32>
      %26 = arith.index_cast %c1_i32_17 : i32 to index
      %c0_19 = arith.constant 0 : index
      %27 = vector.load %arg10[%26, %c0_19] : memref<8x256xf32, #tpu.memory_space<vmem>>, vector<1x256xf32>
      tpu.vector_store %arg10[%26, %c0_19], %25 {strides = array<i32>} : memref<8x256xf32, #tpu.memory_space<vmem>>, vector<1x256xf32>,
      %c2_i32 = arith.constant 2 : i32
      %28 = arith.addi %13, %c2_i32 : i32
      %29 = arith.index_cast %28 : i32 to index
      %30 = memref.load %arg0[%29] : memref<24xi32, #tpu.memory_space<smem>>
      %31 = arith.index_cast %30 : i32 to index
      %c0_20 = arith.constant 0 : index
      %32 = vector.load %arg8[%31, %c0_20] : memref<32x256xf32, #tpu.memory_space<vmem>>, vector<1x256xf32>
      %33 = arith.index_cast %c2_i32 : i32 to index
      %c0_21 = arith.constant 0 : index
      %34 = vector.load %arg10[%33, %c0_21] : memref<8x256xf32, #tpu.memory_space<vmem>>, vector<1x256xf32>
      tpu.vector_store %arg10[%33, %c0_21], %32 {strides = array<i32>} : memref<8x256xf32, #tpu.memory_space<vmem>>, vector<1x256xf32>,
      %c3_i32_22 = arith.constant 3 : i32
      %35 = arith.addi %13, %c3_i32_22 : i32
      %36 = arith.index_cast %35 : i32 to index
      %37 = memref.load %arg0[%36] : memref<24xi32, #tpu.memory_space<smem>>
      %38 = arith.index_cast %37 : i32 to index
      %c0_23 = arith.constant 0 : index
      %39 = vector.load %arg8[%38, %c0_23] : memref<32x256xf32, #tpu.memory_space<vmem>>, vector<1x256xf32>
      %40 = arith.index_cast %c3_i32_22 : i32 to index
      %c0_24 = arith.constant 0 : index
      %41 = vector.load %arg10[%40, %c0_24] : memref<8x256xf32, #tpu.memory_space<vmem>>, vector<1x256xf32>
      tpu.vector_store %arg10[%40, %c0_24], %39 {strides = array<i32>} : memref<8x256xf32, #tpu.memory_space<vmem>>, vector<1x256xf32>,
      %c4_i32 = arith.constant 4 : i32
      %42 = arith.addi %13, %c4_i32 : i32
      %43 = arith.index_cast %42 : i32 to index
      %44 = memref.load %arg0[%43] : memref<24xi32, #tpu.memory_space<smem>>
      %45 = arith.index_cast %44 : i32 to index
      %c0_25 = arith.constant 0 : index
      %46 = vector.load %arg8[%45, %c0_25] : memref<32x256xf32, #tpu.memory_space<vmem>>, vector<1x256xf32>
      %47 = arith.index_cast %c4_i32 : i32 to index
      %c0_26 = arith.constant 0 : index
      %48 = vector.load %arg10[%47, %c0_26] : memref<8x256xf32, #tpu.memory_space<vmem>>, vector<1x256xf32>
      tpu.vector_store %arg10[%47, %c0_26], %46 {strides = array<i32>} : memref<8x256xf32, #tpu.memory_space<vmem>>, vector<1x256xf32>,
      %c5_i32 = arith.constant 5 : i32
      %49 = arith.addi %13, %c5_i32 : i32
      %50 = arith.index_cast %49 : i32 to index
      %51 = memref.load %arg0[%50] : memref<24xi32, #tpu.memory_space<smem>>
      %52 = arith.index_cast %51 : i32 to index
      %c0_27 = arith.constant 0 : index
      %53 = vector.load %arg8[%52, %c0_27] : memref<32x256xf32, #tpu.memory_space<vmem>>, vector<1x256xf32>
      %54 = arith.index_cast %c5_i32 : i32 to index
      %c0_28 = arith.constant 0 : index
      %55 = vector.load %arg10[%54, %c0_28] : memref<8x256xf32, #tpu.memory_space<vmem>>, vector<1x256xf32>
      tpu.vector_store %arg10[%54, %c0_28], %53 {strides = array<i32>} : memref<8x256xf32, #tpu.memory_space<vmem>>, vector<1x256xf32>,
      %c6_i32 = arith.constant 6 : i32
      %56 = arith.addi %13, %c6_i32 : i32
      %57 = arith.index_cast %56 : i32 to index
      %58 = memref.load %arg0[%57] : memref<24xi32, #tpu.memory_space<smem>>
      %59 = arith.index_cast %58 : i32 to index
      %c0_29 = arith.constant 0 : index
      %60 = vector.load %arg8[%59, %c0_29] : memref<32x256xf32, #tpu.memory_space<vmem>>, vector<1x256xf32>
      %61 = arith.index_cast %c6_i32 : i32 to index
      %c0_30 = arith.constant 0 : index
      %62 = vector.load %arg10[%61, %c0_30] : memref<8x256xf32, #tpu.memory_space<vmem>>, vector<1x256xf32>
      tpu.vector_store %arg10[%61, %c0_30], %60 {strides = array<i32>} : memref<8x256xf32, #tpu.memory_space<vmem>>, vector<1x256xf32>,
      %c7_i32 = arith.constant 7 : i32
      %63 = arith.addi %13, %c7_i32 : i32
      %64 = arith.index_cast %63 : i32 to index
      %65 = memref.load %arg0[%64] : memref<24xi32, #tpu.memory_space<smem>>
      %66 = arith.index_cast %65 : i32 to index
      %c0_31 = arith.constant 0 : index
      %67 = vector.load %arg8[%66, %c0_31] : memref<32x256xf32, #tpu.memory_space<vmem>>, vector<1x256xf32>
      %68 = arith.index_cast %c7_i32 : i32 to index
      %c0_32 = arith.constant 0 : index
      %69 = vector.load %arg10[%68, %c0_32] : memref<8x256xf32, #tpu.memory_space<vmem>>, vector<1x256xf32>
      tpu.vector_store %arg10[%68, %c0_32], %67 {strides = array<i32>} : memref<8x256xf32, #tpu.memory_space<vmem>>, vector<1x256xf32>,
      %c8_i32_33 = arith.constant 8 : i32
      %c0_34 = arith.constant 0 : index
      %c0_35 = arith.constant 0 : index
      %70 = vector.load %arg10[%c0_34, %c0_35] : memref<8x256xf32, #tpu.memory_space<vmem>>, vector<8x256xf32>
      %71 = vector.extract_strided_slice %70 {offsets = [0, 0], sizes = [8, 128], strides = [1, 1]} : vector<8x256xf32> to vector<8x128xf32>
      %72 = vector.extract_strided_slice %70 {offsets = [0, 128], sizes = [8, 128], strides = [1, 1]} : vector<8x256xf32> to vector<8x128xf32>
      %cst_36 = arith.constant dense<0.000000e+00> : vector<8x1024xf32>
      %73 = tpu.matmul %72, %9, %cst_36 {dimension_numbers = #tpu.dot_dimension_numbers<[1], [0], [0], [1], [0, 0, 1, 1], [], []>} : vector<8x128xf32>, vector<128x1024xf32>, vector<8x1024xf32> -> vector<8x1024xf32>
      %74 = vector.broadcast %10 : vector<1x1024xf32> to vector<8x1024xf32>
      %75 = arith.addf %73, %74 : vector<8x1024xf32>
      %76 = arith.index_cast %13 : i32 to index
      %c0_37 = arith.constant 0 : index
      %77 = vector.load %arg9[%76, %c0_37] : memref<24x1024xf32, #tpu.memory_space<vmem>>, vector<8x1024xf32>
      %78 = arith.addf %77, %75 : vector<8x1024xf32>
      %79 = vector.extract_strided_slice %78 {offsets = [0, 0], sizes = [8, 768], strides = [1, 1]} : vector<8x1024xf32> to vector<8x768xf32>
      %80 = arith.negf %79 : vector<8x768xf32>
      %81 = math.exp %80 : vector<8x768xf32>
      %cst_38 = arith.constant 1.000000e+00 : f32
      %82 = vector.broadcast %cst_38 : f32 to vector<8x768xf32>
      %83 = arith.addf %82, %81 : vector<8x768xf32>
      %84 = arith.divf %82, %83 : vector<8x768xf32>
      %85 = vector.extract_strided_slice %78 {offsets = [0, 768], sizes = [8, 256], strides = [1, 1]} : vector<8x1024xf32> to vector<8x256xf32>
      %86 = math.tanh %85 : vector<8x256xf32>
      %87 = vector.extract_strided_slice %84 {offsets = [0, 0], sizes = [8, 128], strides = [1, 1]} : vector<8x768xf32> to vector<8x128xf32>
      %88 = vector.extract_strided_slice %84 {offsets = [0, 128], sizes = [8, 128], strides = [1, 1]} : vector<8x768xf32> to vector<8x128xf32>
      %89 = vector.extract_strided_slice %84 {offsets = [0, 256], sizes = [8, 128], strides = [1, 1]} : vector<8x768xf32> to vector<8x128xf32>
      %90 = vector.extract_strided_slice %84 {offsets = [0, 384], sizes = [8, 128], strides = [1, 1]} : vector<8x768xf32> to vector<8x128xf32>
      %91 = vector.extract_strided_slice %84 {offsets = [0, 512], sizes = [8, 128], strides = [1, 1]} : vector<8x768xf32> to vector<8x128xf32>
      %92 = vector.extract_strided_slice %84 {offsets = [0, 640], sizes = [8, 128], strides = [1, 1]} : vector<8x768xf32> to vector<8x128xf32>
      %93 = vector.extract_strided_slice %86 {offsets = [0, 0], sizes = [8, 128], strides = [1, 1]} : vector<8x256xf32> to vector<8x128xf32>
      %94 = vector.extract_strided_slice %86 {offsets = [0, 128], sizes = [8, 128], strides = [1, 1]} : vector<8x256xf32> to vector<8x128xf32>
      %95 = arith.mulf %87, %93 : vector<8x128xf32>
      %96 = arith.mulf %89, %71 : vector<8x128xf32>
      %97 = arith.addf %95, %96 : vector<8x128xf32>
      %98 = math.tanh %97 : vector<8x128xf32>
      %99 = arith.mulf %88, %98 : vector<8x128xf32>
      %100 = arith.mulf %90, %94 : vector<8x128xf32>
      %101 = arith.mulf %92, %71 : vector<8x128xf32>
      %102 = arith.addf %100, %101 : vector<8x128xf32>
      %103 = math.tanh %102 : vector<8x128xf32>
      %104 = arith.mulf %91, %103 : vector<8x128xf32>
      %105 = arith.index_cast %13 : i32 to index
      %c0_39 = arith.constant 0 : index
      %106 = vector.load %arg6[%105, %c0_39] : memref<24x1xf32, #tpu.memory_space<vmem>>, vector<8x1xf32>
      %107 = arith.index_cast %13 : i32 to index
      %c0_40 = arith.constant 0 : index
      %108 = vector.load %arg7[%107, %c0_40] : memref<24x1xf32, #tpu.memory_space<vmem>>, vector<8x1xf32>
      %109 = vector.broadcast %106 : vector<8x1xf32> to vector<8x128xf32>
      %110 = arith.mulf %109, %102 : vector<8x128xf32>
      %111 = vector.broadcast %108 : vector<8x1xf32> to vector<8x128xf32>
      %112 = arith.mulf %111, %97 : vector<8x128xf32>
      %113 = arith.addf %110, %112 : vector<8x128xf32>
      %114 = vector.broadcast %106 : vector<8x1xf32> to vector<8x128xf32>
      %115 = arith.mulf %114, %104 : vector<8x128xf32>
      %116 = vector.broadcast %108 : vector<8x1xf32> to vector<8x128xf32>
      %117 = arith.mulf %116, %99 : vector<8x128xf32>
      %118 = arith.addf %115, %117 : vector<8x128xf32>
      %119 = tpu.concatenate %113, %118 in 1 : vector<8x128xf32>, vector<8x128xf32> -> vector<8x256xf32>
      %120 = arith.index_cast %13 : i32 to index
      %c0_41 = arith.constant 0 : index
      %121 = vector.load %arg8[%120, %c0_41] : memref<32x256xf32, #tpu.memory_space<vmem>>, vector<8x256xf32>
      tpu.vector_store %arg8[%120, %c0_41], %119 {strides = array<i32>} : memref<32x256xf32, #tpu.memory_space<vmem>>, vector<8x256xf32>,
    }
    %c3_i32_13 = arith.constant 3 : i32
    return
  }
}

</mosaic_0001>

<llo_original>
// kernel: tpu_custom_call.1
$region0: #{tpu_custom_call.1}
  #allocation0 [shape = 'u32[]', space=smem, size = 0x4, offset = 0x4, fixed_abs, tag = 'smem constant byte address 0x4 - core index']
  #allocation1 [shape = 'u32[144,128]{1,0:T(1,128)}', space=vmem, size = 0x12000, scoped, tag = 'internal scratch']
  #allocation2 [shape = 'f32[24,1024]{1,0:T(8,128)}', space=vmem, size = 0x18000, scoped, tag = 'scratch operand']
  #allocation3 [shape = 'f32[8,256]{1,0:T(8,128)}', space=vmem, size = 0x2000, scoped, tag = 'scratch operand']
  %s0 = inlined_call_operand.vmem [shape: s32[24], index: 0, kind: input, shape index: {}]
  %s1 = inlined_call_operand.vmem [shape: f32[24,32], index: 1, kind: input, shape index: {}]
  %s2 = inlined_call_operand.hbm [shape: f32[32,1024], index: 2, kind: input, shape index: {}]
  %s3 = inlined_call_operand.vmem [shape: f32[1,1024], index: 3, kind: input, shape index: {}]
  %s4 = inlined_call_operand.hbm [shape: f32[128,1024], index: 4, kind: input, shape index: {}]
  %s5 = inlined_call_operand.vmem [shape: f32[1,1024], index: 5, kind: input, shape index: {}]
  %s6 = inlined_call_operand.vmem [shape: f32[24,1], index: 6, kind: input, shape index: {}]
  %s7 = inlined_call_operand.vmem [shape: f32[24,1], index: 7, kind: input, shape index: {}]
  %s8 = inlined_call_operand.hbm [shape: f32[32,256], index: 8, kind: output, shape index: {}]
  %s9 = sld [smem:[#allocation0]]
  $region61: #{tpu_custom_call.1} parent=0
    _
  %s11 = ssub.s32 1, %s9
  %s12 = scalar_select 0, %s11, %s9
  $region1: #{tpu_custom_call.1} parent=0
    #allocation4 [shape = 'u8[512]{0}', space=smem, size = 0x200, scoped, tag = 'input window, operand 0, single buffered']
    #allocation5 [shape = 's32[1]{0}', space=sflag, size = 0x4, scoped, tag = 'scoped memory for tpu_custom_call.1']
    #allocation6 [shape = 's32[1]{0}', space=sflag, size = 0x4, scoped, tag = 'scoped memory for tpu_custom_call.1']
    #allocation7 [shape = 's32[1]{0}', space=sflag, size = 0x4, scoped, tag = 'scoped memory for tpu_custom_call.1']
    #allocation8 [shape = 'u8[131072]{0}', space=vmem, size = 0x20000, scoped, tag = 'input window, operand 2, single buffered']
    #allocation9 [shape = 'u8[524288]{0}', space=vmem, size = 0x80000, scoped, tag = 'input window, operand 4, single buffered']
    #allocation10 [shape = 's32[1]{0}', space=sflag, size = 0x4, scoped, tag = 'scoped memory for tpu_custom_call.1']
    #allocation11 [shape = 'u8[32768]{0}', space=vmem, size = 0x8000, scoped, tag = 'output window, operand 0, single buffered']
    %13 = vsyncpa [#allocation7], 0
    %14 = vsyncpa [#allocation5], 0
    %15 = vsyncpa [#allocation10], 0
    %16 = vsyncpa [#allocation6], 0
    // Predicated region
    $region2: #{tpu_custom_call.1} parent=1 // pred_check
      _
    $region3: #{tpu_custom_call.1} parent=1 // pred_check_branch
      %18 = sbr.rel (0) target = $region5
    $region4: #{tpu_custom_call.1} parent=1 // pred_region
      %s20 = ssub.s32 16, 16
      %21 = vsyncadd [#allocation7], %s20
      %s23 = sshll.u32 %s0, 4
      %s24 = int_to_ptr.vmem [resolvable:$true] %s23
      %26 = dma.vmem_to_smem %s24, 16, [#allocation4], [#allocation7]
    $region5: #{tpu_custom_call.1} parent=1 // pred_fallthru
      _
    // Predicated region
    $region6: #{tpu_custom_call.1} parent=1 // pred_check
      _
    $region7: #{tpu_custom_call.1} parent=1 // pred_check_branch
      %28 = sbr.rel (0) target = $region9
    $region8: #{tpu_custom_call.1} parent=1 // pred_region
      _
    $region9: #{tpu_custom_call.1} parent=1 // pred_fallthru
      _
    // Predicated region
    $region10: #{tpu_custom_call.1} parent=1 // pred_check
      _
    $region11: #{tpu_custom_call.1} parent=1 // pred_check_branch
      %30 = sbr.rel (0) target = $region13
    $region12: #{tpu_custom_call.1} parent=1 // pred_region
      %s32 = ssub.s32 4096, 4096
      %33 = vsyncadd [#allocation5], %s32
      %s34 = sshll.u32 [#allocation8], 4
      %s35 = int_to_ptr.vmem [resolvable:$true] %s34
      %40 = dma.hbm_to_vmem [thread:$0]  %s2, 4096, %s35, [#allocation5], 1024, 1024, 64
    $region13: #{tpu_custom_call.1} parent=1 // pred_fallthru
      _
    // Predicated region
    $region14: #{tpu_custom_call.1} parent=1 // pred_check
      _
    $region15: #{tpu_custom_call.1} parent=1 // pred_check_branch
      %42 = sbr.rel (0) target = $region17
    $region16: #{tpu_custom_call.1} parent=1 // pred_region
      _
    $region17: #{tpu_custom_call.1} parent=1 // pred_fallthru
      _
    // Predicated region
    $region18: #{tpu_custom_call.1} parent=1 // pred_check
      _
    $region19: #{tpu_custom_call.1} parent=1 // pred_check_branch
      %44 = sbr.rel (0) target = $region21
    $region20: #{tpu_custom_call.1} parent=1 // pred_region
      %s46 = ssub.s32 16384, 16384
      %47 = vsyncadd [#allocation10], %s46
      %s48 = sshll.u32 [#allocation9], 4
      %s49 = int_to_ptr.vmem [resolvable:$true] %s48
      %54 = dma.hbm_to_vmem [thread:$0]  %s4, 16384, %s49, [#allocation10], 1024, 1024, 64
    $region21: #{tpu_custom_call.1} parent=1 // pred_fallthru
      _
    // Predicated region
    $region22: #{tpu_custom_call.1} parent=1 // pred_check
      _
    $region23: #{tpu_custom_call.1} parent=1 // pred_check_branch
      %56 = sbr.rel (0) target = $region25
    $region24: #{tpu_custom_call.1} parent=1 // pred_region
      _
    $region25: #{tpu_custom_call.1} parent=1 // pred_fallthru
      _
    // Predicated region
    $region26: #{tpu_custom_call.1} parent=1 // pred_check
      _
    $region27: #{tpu_custom_call.1} parent=1 // pred_check_branch
      %58 = sbr.rel (0) target = $region29
    $region28: #{tpu_custom_call.1} parent=1 // pred_region
      _
    $region29: #{tpu_custom_call.1} parent=1 // pred_fallthru
      _
    // Predicated region
    $region30: #{tpu_custom_call.1} parent=1 // pred_check
      _
    $region31: #{tpu_custom_call.1} parent=1 // pred_check_branch
      %60 = sbr.rel (0) target = $region33
    $region32: #{tpu_custom_call.1} parent=1 // pred_region
      _
    $region33: #{tpu_custom_call.1} parent=1 // pred_fallthru
      _
    // Predicated region
    $region34: #{tpu_custom_call.1} parent=1 // pred_check
      _
    $region35: #{tpu_custom_call.1} parent=1 // pred_check_branch
      %62 = sbr.rel (0) target = $region37
    $region36: #{tpu_custom_call.1} parent=1 // pred_region
      %63 = dma.done [#allocation7], 16
    $region37: #{tpu_custom_call.1} parent=1 // pred_fallthru
      _
    // Predicated region
    $region38: #{tpu_custom_call.1} parent=1 // pred_check
      _
    $region39: #{tpu_custom_call.1} parent=1 // pred_check_branch
      %65 = sbr.rel (0) target = $region41
    $region40: #{tpu_custom_call.1} parent=1 // pred_region
      %66 = dma.done [#allocation5], 4096
    $region41: #{tpu_custom_call.1} parent=1 // pred_fallthru
      _
    // Predicated region
    $region42: #{tpu_custom_call.1} parent=1 // pred_check
      _
    $region43: #{tpu_custom_call.1} parent=1 // pred_check_branch
      %68 = sbr.rel (0) target = $region45
    $region44: #{tpu_custom_call.1} parent=1 // pred_region
      %69 = dma.done [#allocation10], 16384
    $region45: #{tpu_custom_call.1} parent=1 // pred_fallthru
      _
    %70 = sfence
    %71 = vst [vmem:[#allocation11 + $0x30] sm:$0xff] 0.0
    %72 = vst [vmem:[#allocation11 + $0x38] sm:$0xff] 0.0
    %v73 = vld [vmem:[%s1] sm:$0xff]
    %v74 = vld [vmem:[%s1 + $0x8] sm:$0xff]
    %v75 = vld [vmem:[%s1 + $0x10] sm:$0xff]
    %v76 = vld [vmem:[#allocation8] sm:$0xff]
    %v77 = vld [vmem:[#allocation8 + $0x8] sm:$0xff]
    %v78 = vld [vmem:[#allocation8 + $0x10] sm:$0xff]
    %v79 = vld [vmem:[#allocation8 + $0x18] sm:$0xff]
    %v80 = vld [vmem:[#allocation8 + $0x20] sm:$0xff]
    %v81 = vld [vmem:[#allocation8 + $0x28] sm:$0xff]
    %v82 = vld [vmem:[#allocation8 + $0x30] sm:$0xff]
    %v83 = vld [vmem:[#allocation8 + $0x38] sm:$0xff]
    %v84 = vld [vmem:[#allocation8 + $0x40] sm:$0xff]
    %v85 = vld [vmem:[#allocation8 + $0x48] sm:$0xff]
    %v86 = vld [vmem:[#allocation8 + $0x50] sm:$0xff]
    %v87 = vld [vmem:[#allocation8 + $0x58] sm:$0xff]
    %v88 = vld [vmem:[#allocation8 + $0x60] sm:$0xff]
    %v89 = vld [vmem:[#allocation8 + $0x68] sm:$0xff]
    %v90 = vld [vmem:[#allocation8 + $0x70] sm:$0xff]
    %v91 = vld [vmem:[#allocation8 + $0x78] sm:$0xff]
    %v92 = vld [vmem:[#allocation8 + $0x80] sm:$0xff]
    %v93 = vld [vmem:[#allocation8 + $0x88] sm:$0xff]
    %v94 = vld [vmem:[#allocation8 + $0x90] sm:$0xff]
    %v95 = vld [vmem:[#allocation8 + $0x98] sm:$0xff]
    %v96 = vld [vmem:[#allocation8 + $0xa0] sm:$0xff]
    %v97 = vld [vmem:[#allocation8 + $0xa8] sm:$0xff]
    %v98 = vld [vmem:[#allocation8 + $0xb0] sm:$0xff]
    %v99 = vld [vmem:[#allocation8 + $0xb8] sm:$0xff]
    %v100 = vld [vmem:[#allocation8 + $0xc0] sm:$0xff]
    %v101 = vld [vmem:[#allocation8 + $0xc8] sm:$0xff]
    %v102 = vld [vmem:[#allocation8 + $0xd0] sm:$0xff]
    %v103 = vld [vmem:[#allocation8 + $0xd8] sm:$0xff]
    %v104 = vld [vmem:[#allocation8 + $0xe0] sm:$0xff]
    %v105 = vld [vmem:[#allocation8 + $0xe8] sm:$0xff]
    %v106 = vld [vmem:[#allocation8 + $0xf0] sm:$0xff]
    %v107 = vld [vmem:[#allocation8 + $0xf8] sm:$0xff]
    %v108 = vld [vmem:[%s3] sm:$0xff]
    %v110 = vlaneseq
    %v111 = vshrl.u32 %v110, 7
    %v112 = vsub.s32 0, %v111
    %v113 = vrot.slane %v108, %v112
    %v114 = vlaneseq
    %v115 = vshrl.u32 %v114, 7
    %v116 = vsub.s32 1, %v115
    %v117 = vrot.slane %v108, %v116
    %v118 = vlaneseq
    %v119 = vshrl.u32 %v118, 7
    %v120 = vsub.s32 2, %v119
    %v121 = vrot.slane %v108, %v120
    %v122 = vlaneseq
    %v123 = vshrl.u32 %v122, 7
    %v124 = vsub.s32 3, %v123
    %v125 = vrot.slane %v108, %v124
    %v126 = vlaneseq
    %v127 = vshrl.u32 %v126, 7
    %v128 = vsub.s32 4, %v127
    %v129 = vrot.slane %v108, %v128
    %v130 = vlaneseq
    %v131 = vshrl.u32 %v130, 7
    %v132 = vsub.s32 5, %v131
    %v133 = vrot.slane %v108, %v132
    %v134 = vlaneseq
    %v135 = vshrl.u32 %v134, 7
    %v136 = vsub.s32 6, %v135
    %v137 = vrot.slane %v108, %v136
    %v138 = vlaneseq
    %v139 = vshrl.u32 %v138, 7
    %v140 = vsub.s32 7, %v139
    %v141 = vrot.slane %v108, %v140
    %vm150 = vcmask 261120
    %v152 = vsel %vm150, %v73, 0
    %v155 = vsel %vm150, %v74, 0
    %v158 = vsel %vm150, %v75, 0
    %160 = vmatprep.subr.mxu0 %v77
    %161 = vmatpush1.msra.mxu0 %v76
    %162 = vmatprep.subr.mxu0 %v85
    %163 = vmatpush1.msra.mxu0 %v84
    %164 = vmatprep.subr.mxu0 %v93
    %165 = vmatpush1.msra.mxu0 %v92
    %166 = vmatprep.subr.mxu0 %v101
    %167 = vmatpush1.msra.mxu0 %v100
    %168 = vmatprep.subr.mxu0 0.0
    %169 = vmatpush1.msra.mxu0 0.0
    %170 = vmatprep.subr.mxu0 0.0
    %171 = vmatpush1.msra.mxu0 0.0
    %172 = vmatprep.subr.mxu0 0.0
    %173 = vmatpush1.msra.mxu0 0.0
    %174 = vmatprep.subr.mxu0 0.0
    %175 = vmatpush1.msra.mxu0 0.0
    %176 = vmatprep.subr.mxu0 0.0
    %177 = vmatpush1.msra.mxu0 0.0
    %178 = vmatprep.subr.mxu0 0.0
    %179 = vmatpush1.msra.mxu0 0.0
    %180 = vmatprep.subr.mxu0 0.0
    %181 = vmatpush1.msra.mxu0 0.0
    %182 = vmatprep.subr.mxu0 0.0
    %183 = vmatpush1.msra.mxu0 0.0
    %184 = vmatprep.subr.mxu0 0.0
    %185 = vmatpush1.msra.mxu0 0.0
    %186 = vmatprep.subr.mxu0 0.0
    %187 = vmatpush1.msra.mxu0 0.0
    %188 = vmatprep.subr.mxu0 0.0
    %189 = vmatpush1.msra.mxu0 0.0
    %190 = vmatprep.subr.mxu0 0.0
    %191 = vmatpush1.msra.mxu0 0.0
    %192 = vmatprep.subr.mxu0 0.0
    %193 = vmatpush1.msra.mxu0 0.0
    %194 = vmatprep.subr.mxu0 0.0
    %195 = vmatpush1.msra.mxu0 0.0
    %196 = vmatprep.subr.mxu0 0.0
    %197 = vmatpush1.msra.mxu0 0.0
    %198 = vmatprep.subr.mxu0 0.0
    %199 = vmatpush1.msra.mxu0 0.0
    %200 = vmatprep.subr.mxu0 0.0
    %201 = vmatpush1.msra.mxu0 0.0
    %202 = vmatprep.subr.mxu0 0.0
    %203 = vmatpush1.msra.mxu0 0.0
    %204 = vmatprep.subr.mxu0 0.0
    %205 = vmatpush1.msra.mxu0 0.0
    %206 = vmatprep.subr.mxu0 0.0
    %207 = vmatpush1.msra.mxu0 0.0
    %208 = vmatprep.subr.mxu0 0.0
    %209 = vmatpush1.msra.mxu0 0.0
    %210 = vmatprep.subr.mxu0 0.0
    %211 = vmatpush1.msra.mxu0 0.0
    %212 = vmatprep.subr.mxu0 0.0
    %213 = vmatpush1.msra.mxu0 0.0
    %214 = vmatprep.subr.mxu0 0.0
    %215 = vmatpush1.msra.mxu0 0.0
    %216 = vmatprep.subr.mxu0 0.0
    %217 = vmatpush1.msra.mxu0 0.0
    %218 = vmatprep.subr.mxu0 0.0
    %219 = vmatpush1.msra.mxu0 0.0
    %220 = vmatprep.subr.mxu0 0.0
    %221 = vmatpush1.msra.mxu0 0.0
    %222 = vmatprep.subr.mxu0 0.0
    %223 = vmatpush1.msra.mxu0 0.0
    %224 = vmatprep.mubr.f32.mxu0 0.0
    %225 = vmatmul.mubr.f32.gmra.mrb[0].mxu0 %v152
    %v226 = vpop.f32.mrb[0].mxu0
    %v227 = vadd.f32 %v113, %v226
    %v228 = vpop.f32.mrb[0].mxu0
    %v229 = vadd.f32 %v117, %v228
    %230 = vmatprep.mubr.f32.mxu0 0.0
    %231 = vmatmul.mubr.f32.gmra.mrb[0].mxu0 %v155
    %v232 = vpop.f32.mrb[0].mxu0
    %v233 = vadd.f32 %v113, %v232
    %v234 = vpop.f32.mrb[0].mxu0
    %v235 = vadd.f32 %v117, %v234
    %236 = vmatprep.mubr.f32.mxu0 0.0
    %237 = vmatmul.mubr.f32.gmra.mrb[0].mxu0 %v158
    %v238 = vpop.f32.mrb[0].mxu0
    %v239 = vadd.f32 %v113, %v238
    %v240 = vpop.f32.mrb[0].mxu0
    %v241 = vadd.f32 %v117, %v240
    %242 = vdwg.mxu0
    %243 = vmatprep.subr.mxu0 %v79
    %244 = vmatpush1.msra.mxu0 %v78
    %245 = vmatprep.subr.mxu0 %v87
    %246 = vmatpush1.msra.mxu0 %v86
    %247 = vmatprep.subr.mxu0 %v95
    %248 = vmatpush1.msra.mxu0 %v94
    %249 = vmatprep.subr.mxu0 %v103
    %250 = vmatpush1.msra.mxu0 %v102
    %251 = vmatprep.subr.mxu0 0.0
    %252 = vmatpush1.msra.mxu0 0.0
    %253 = vmatprep.subr.mxu0 0.0
    %254 = vmatpush1.msra.mxu0 0.0
    %255 = vmatprep.subr.mxu0 0.0
    %256 = vmatpush1.msra.mxu0 0.0
    %257 = vmatprep.subr.mxu0 0.0
    %258 = vmatpush1.msra.mxu0 0.0
    %259 = vmatprep.subr.mxu0 0.0
    %260 = vmatpush1.msra.mxu0 0.0
    %261 = vmatprep.subr.mxu0 0.0
    %262 = vmatpush1.msra.mxu0 0.0
    %263 = vmatprep.subr.mxu0 0.0
    %264 = vmatpush1.msra.mxu0 0.0
    %265 = vmatprep.subr.mxu0 0.0
    %266 = vmatpush1.msra.mxu0 0.0
    %267 = vmatprep.subr.mxu0 0.0
    %268 = vmatpush1.msra.mxu0 0.0
    %269 = vmatprep.subr.mxu0 0.0
    %270 = vmatpush1.msra.mxu0 0.0
    %271 = vmatprep.subr.mxu0 0.0
    %272 = vmatpush1.msra.mxu0 0.0
    %273 = vmatprep.subr.mxu0 0.0
    %274 = vmatpush1.msra.mxu0 0.0
    %275 = vmatprep.subr.mxu0 0.0
    %276 = vmatpush1.msra.mxu0 0.0
    %277 = vmatprep.subr.mxu0 0.0
    %278 = vmatpush1.msra.mxu0 0.0
    %279 = vmatprep.subr.mxu0 0.0
    %280 = vmatpush1.msra.mxu0 0.0
    %281 = vmatprep.subr.mxu0 0.0
    %282 = vmatpush1.msra.mxu0 0.0
    %283 = vmatprep.subr.mxu0 0.0
    %284 = vmatpush1.msra.mxu0 0.0
    %285 = vmatprep.subr.mxu0 0.0
    %286 = vmatpush1.msra.mxu0 0.0
    %287 = vmatprep.subr.mxu0 0.0
    %288 = vmatpush1.msra.mxu0 0.0
    %289 = vmatprep.subr.mxu0 0.0
    %290 = vmatpush1.msra.mxu0 0.0
    %291 = vmatprep.subr.mxu0 0.0
    %292 = vmatpush1.msra.mxu0 0.0
    %293 = vmatprep.subr.mxu0 0.0
    %294 = vmatpush1.msra.mxu0 0.0
    %295 = vmatprep.subr.mxu0 0.0
    %296 = vmatpush1.msra.mxu0 0.0
    %297 = vmatprep.subr.mxu0 0.0
    %298 = vmatpush1.msra.mxu0 0.0
    %299 = vmatprep.subr.mxu0 0.0
    %300 = vmatpush1.msra.mxu0 0.0
    %301 = vmatprep.subr.mxu0 0.0
    %302 = vmatpush1.msra.mxu0 0.0
    %303 = vmatprep.subr.mxu0 0.0
    %304 = vmatpush1.msra.mxu0 0.0
    %305 = vmatprep.subr.mxu0 0.0
    %306 = vmatpush1.msra.mxu0 0.0
    %307 = vmatprep.mubr.f32.mxu0 0.0
    %308 = vmatmul.mubr.f32.gmra.mrb[0].mxu0 %v152
    %v309 = vpop.f32.mrb[0].mxu0
    %v310 = vadd.f32 %v121, %v309
    %v311 = vpop.f32.mrb[0].mxu0
    %v312 = vadd.f32 %v125, %v311
    %313 = vmatprep.mubr.f32.mxu0 0.0
    %314 = vmatmul.mubr.f32.gmra.mrb[0].mxu0 %v155
    %v315 = vpop.f32.mrb[0].mxu0
    %v316 = vadd.f32 %v121, %v315
    %v317 = vpop.f32.mrb[0].mxu0
    %v318 = vadd.f32 %v125, %v317
    %319 = vmatprep.mubr.f32.mxu0 0.0
    %320 = vmatmul.mubr.f32.gmra.mrb[0].mxu0 %v158
    %v321 = vpop.f32.mrb[0].mxu0
    %v322 = vadd.f32 %v121, %v321
    %v323 = vpop.f32.mrb[0].mxu0
    %v324 = vadd.f32 %v125, %v323
    %325 = vdwg.mxu0
    %326 = vmatprep.subr.mxu0 %v81
    %327 = vmatpush1.msra.mxu0 %v80
    %328 = vmatprep.subr.mxu0 %v89
    %329 = vmatpush1.msra.mxu0 %v88
    %330 = vmatprep.subr.mxu0 %v97
    %331 = vmatpush1.msra.mxu0 %v96
    %332 = vmatprep.subr.mxu0 %v105
    %333 = vmatpush1.msra.mxu0 %v104
    %334 = vmatprep.subr.mxu0 0.0
    %335 = vmatpush1.msra.mxu0 0.0
    %336 = vmatprep.subr.mxu0 0.0
    %337 = vmatpush1.msra.mxu0 0.0
    %338 = vmatprep.subr.mxu0 0.0
    %339 = vmatpush1.msra.mxu0 0.0
    %340 = vmatprep.subr.mxu0 0.0
    %341 = vmatpush1.msra.mxu0 0.0
    %342 = vmatprep.subr.mxu0 0.0
    %343 = vmatpush1.msra.mxu0 0.0
    %344 = vmatprep.subr.mxu0 0.0
    %345 = vmatpush1.msra.mxu0 0.0
    %346 = vmatprep.subr.mxu0 0.0
    %347 = vmatpush1.msra.mxu0 0.0
    %348 = vmatprep.subr.mxu0 0.0
    %349 = vmatpush1.msra.mxu0 0.0
    %350 = vmatprep.subr.mxu0 0.0
    %351 = vmatpush1.msra.mxu0 0.0
    %352 = vmatprep.subr.mxu0 0.0
    %353 = vmatpush1.msra.mxu0 0.0
    %354 = vmatprep.subr.mxu0 0.0
    %355 = vmatpush1.msra.mxu0 0.0
    %356 = vmatprep.subr.mxu0 0.0
    %357 = vmatpush1.msra.mxu0 0.0
    %358 = vmatprep.subr.mxu0 0.0
    %359 = vmatpush1.msra.mxu0 0.0
    %360 = vmatprep.subr.mxu0 0.0
    %361 = vmatpush1.msra.mxu0 0.0
    %362 = vmatprep.subr.mxu0 0.0
    %363 = vmatpush1.msra.mxu0 0.0
    %364 = vmatprep.subr.mxu0 0.0
    %365 = vmatpush1.msra.mxu0 0.0
    %366 = vmatprep.subr.mxu0 0.0
    %367 = vmatpush1.msra.mxu0 0.0
    %368 = vmatprep.subr.mxu0 0.0
    %369 = vmatpush1.msra.mxu0 0.0
    %370 = vmatprep.subr.mxu0 0.0
    %371 = vmatpush1.msra.mxu0 0.0
    %372 = vmatprep.subr.mxu0 0.0
    %373 = vmatpush1.msra.mxu0 0.0
    %374 = vmatprep.subr.mxu0 0.0
    %375 = vmatpush1.msra.mxu0 0.0
    %376 = vmatprep.subr.mxu0 0.0
    %377 = vmatpush1.msra.mxu0 0.0
    %378 = vmatprep.subr.mxu0 0.0
    %379 = vmatpush1.msra.mxu0 0.0
    %380 = vmatprep.subr.mxu0 0.0
    %381 = vmatpush1.msra.mxu0 0.0
    %382 = vmatprep.subr.mxu0 0.0
    %383 = vmatpush1.msra.mxu0 0.0
    %384 = vmatprep.subr.mxu0 0.0
    %385 = vmatpush1.msra.mxu0 0.0
    %386 = vmatprep.subr.mxu0 0.0
    %387 = vmatpush1.msra.mxu0 0.0
    %388 = vmatprep.subr.mxu0 0.0
    %389 = vmatpush1.msra.mxu0 0.0
    %390 = vmatprep.mubr.f32.mxu0 0.0
    %391 = vmatmul.mubr.f32.gmra.mrb[0].mxu0 %v152
    %v392 = vpop.f32.mrb[0].mxu0
    %v393 = vadd.f32 %v129, %v392
    %v394 = vpop.f32.mrb[0].mxu0
    %v395 = vadd.f32 %v133, %v394
    %396 = vmatprep.mubr.f32.mxu0 0.0
    %397 = vmatmul.mubr.f32.gmra.mrb[0].mxu0 %v155
    %v398 = vpop.f32.mrb[0].mxu0
    %v399 = vadd.f32 %v129, %v398
    %v400 = vpop.f32.mrb[0].mxu0
    %v401 = vadd.f32 %v133, %v400
    %402 = vmatprep.mubr.f32.mxu0 0.0
    %403 = vmatmul.mubr.f32.gmra.mrb[0].mxu0 %v158
    %v404 = vpop.f32.mrb[0].mxu0
    %v405 = vadd.f32 %v129, %v404
    %v406 = vpop.f32.mrb[0].mxu0
    %v407 = vadd.f32 %v133, %v406
    %408 = vdwg.mxu0
    %409 = vmatprep.subr.mxu0 %v83
    %410 = vmatpush1.msra.mxu0 %v82
    %411 = vmatprep.subr.mxu0 %v91
    %412 = vmatpush1.msra.mxu0 %v90
    %413 = vmatprep.subr.mxu0 %v99
    %414 = vmatpush1.msra.mxu0 %v98
    %415 = vmatprep.subr.mxu0 %v107
    %416 = vmatpush1.msra.mxu0 %v106
    %417 = vmatprep.subr.mxu0 0.0
    %418 = vmatpush1.msra.mxu0 0.0
    %419 = vmatprep.subr.mxu0 0.0
    %420 = vmatpush1.msra.mxu0 0.0
    %421 = vmatprep.subr.mxu0 0.0
    %422 = vmatpush1.msra.mxu0 0.0
    %423 = vmatprep.subr.mxu0 0.0
    %424 = vmatpush1.msra.mxu0 0.0
    %425 = vmatprep.subr.mxu0 0.0
    %426 = vmatpush1.msra.mxu0 0.0
    %427 = vmatprep.subr.mxu0 0.0
    %428 = vmatpush1.msra.mxu0 0.0
    %429 = vmatprep.subr.mxu0 0.0
    %430 = vmatpush1.msra.mxu0 0.0
    %431 = vmatprep.subr.mxu0 0.0
    %432 = vmatpush1.msra.mxu0 0.0
    %433 = vmatprep.subr.mxu0 0.0
    %434 = vmatpush1.msra.mxu0 0.0
    %435 = vmatprep.subr.mxu0 0.0
    %436 = vmatpush1.msra.mxu0 0.0
    %437 = vmatprep.subr.mxu0 0.0
    %438 = vmatpush1.msra.mxu0 0.0
    %439 = vmatprep.subr.mxu0 0.0
    %440 = vmatpush1.msra.mxu0 0.0
    %441 = vmatprep.subr.mxu0 0.0
    %442 = vmatpush1.msra.mxu0 0.0
    %443 = vmatprep.subr.mxu0 0.0
    %444 = vmatpush1.msra.mxu0 0.0
    %445 = vmatprep.subr.mxu0 0.0
    %446 = vmatpush1.msra.mxu0 0.0
    %447 = vmatprep.subr.mxu0 0.0
    %448 = vmatpush1.msra.mxu0 0.0
    %449 = vmatprep.subr.mxu0 0.0
    %450 = vmatpush1.msra.mxu0 0.0
    %451 = vmatprep.subr.mxu0 0.0
    %452 = vmatpush1.msra.mxu0 0.0
    %453 = vmatprep.subr.mxu0 0.0
    %454 = vmatpush1.msra.mxu0 0.0
    %455 = vmatprep.subr.mxu0 0.0
    %456 = vmatpush1.msra.mxu0 0.0
    %457 = vmatprep.subr.mxu0 0.0
    %458 = vmatpush1.msra.mxu0 0.0
    %459 = vmatprep.subr.mxu0 0.0
    %460 = vmatpush1.msra.mxu0 0.0
    %461 = vmatprep.subr.mxu0 0.0
    %462 = vmatpush1.msra.mxu0 0.0
    %463 = vmatprep.subr.mxu0 0.0
    %464 = vmatpush1.msra.mxu0 0.0
    %465 = vmatprep.subr.mxu0 0.0
    %466 = vmatpush1.msra.mxu0 0.0
    %467 = vmatprep.subr.mxu0 0.0
    %468 = vmatpush1.msra.mxu0 0.0
    %469 = vmatprep.subr.mxu0 0.0
    %470 = vmatpush1.msra.mxu0 0.0
    %471 = vmatprep.subr.mxu0 0.0
    %472 = vmatpush1.msra.mxu0 0.0
    %473 = vmatprep.mubr.f32.mxu0 0.0
    %474 = vmatmul.mubr.f32.gmra.mrb[0].mxu0 %v152
    %v475 = vpop.f32.mrb[0].mxu0
    %v476 = vadd.f32 %v137, %v475
    %v477 = vpop.f32.mrb[0].mxu0
    %v478 = vadd.f32 %v141, %v477
    %479 = vmatprep.mubr.f32.mxu0 0.0
    %480 = vmatmul.mubr.f32.gmra.mrb[0].mxu0 %v155
    %v481 = vpop.f32.mrb[0].mxu0
    %v482 = vadd.f32 %v137, %v481
    %v483 = vpop.f32.mrb[0].mxu0
    %v484 = vadd.f32 %v141, %v483
    %485 = vmatprep.mubr.f32.mxu0 0.0
    %486 = vmatmul.mubr.f32.gmra.mrb[0].mxu0 %v158
    %v487 = vpop.f32.mrb[0].mxu0
    %v488 = vadd.f32 %v137, %v487
    %v489 = vpop.f32.mrb[0].mxu0
    %v490 = vadd.f32 %v141, %v489
    %491 = vdwg.mxu0
    %492 = vst [vmem:[#allocation2] sm:$0xff] %v227
    %493 = vst [vmem:[#allocation2 + $0x8] sm:$0xff] %v229
    %494 = vst [vmem:[#allocation2 + $0x10] sm:$0xff] %v310
    %495 = vst [vmem:[#allocation2 + $0x18] sm:$0xff] %v312
    %496 = vst [vmem:[#allocation2 + $0x20] sm:$0xff] %v393
    %497 = vst [vmem:[#allocation2 + $0x28] sm:$0xff] %v395
    %498 = vst [vmem:[#allocation2 + $0x30] sm:$0xff] %v476
    %499 = vst [vmem:[#allocation2 + $0x38] sm:$0xff] %v478
    %500 = vst [vmem:[#allocation2 + $0x40] sm:$0xff] %v233
    %501 = vst [vmem:[#allocation2 + $0x48] sm:$0xff] %v235
    %502 = vst [vmem:[#allocation2 + $0x50] sm:$0xff] %v316
    %503 = vst [vmem:[#allocation2 + $0x58] sm:$0xff] %v318
    %504 = vst [vmem:[#allocation2 + $0x60] sm:$0xff] %v399
    %505 = vst [vmem:[#allocation2 + $0x68] sm:$0xff] %v401
    %506 = vst [vmem:[#allocation2 + $0x70] sm:$0xff] %v482
    %507 = vst [vmem:[#allocation2 + $0x78] sm:$0xff] %v484
    %508 = vst [vmem:[#allocation2 + $0x80] sm:$0xff] %v239
    %509 = vst [vmem:[#allocation2 + $0x88] sm:$0xff] %v241
    %510 = vst [vmem:[#allocation2 + $0x90] sm:$0xff] %v322
    %511 = vst [vmem:[#allocation2 + $0x98] sm:$0xff] %v324
    %512 = vst [vmem:[#allocation2 + $0xa0] sm:$0xff] %v405
    %513 = vst [vmem:[#allocation2 + $0xa8] sm:$0xff] %v407
    %514 = vst [vmem:[#allocation2 + $0xb0] sm:$0xff] %v488
    %515 = vst [vmem:[#allocation2 + $0xb8] sm:$0xff] %v490
    %v516 = vld [vmem:[#allocation9] sm:$0xff]
    %v517 = vld [vmem:[#allocation9 + $0x8] sm:$0xff]
    %v518 = vld [vmem:[#allocation9 + $0x10] sm:$0xff]
    %v519 = vld [vmem:[#allocation9 + $0x18] sm:$0xff]
    %v520 = vld [vmem:[#allocation9 + $0x20] sm:$0xff]
    %v521 = vld [vmem:[#allocation9 + $0x28] sm:$0xff]
    %v522 = vld [vmem:[#allocation9 + $0x30] sm:$0xff]
    %v523 = vld [vmem:[#allocation9 + $0x38] sm:$0xff]
    %v524 = vld [vmem:[#allocation9 + $0x40] sm:$0xff]
    %v525 = vld [vmem:[#allocation9 + $0x48] sm:$0xff]
    %v526 = vld [vmem:[#allocation9 + $0x50] sm:$0xff]
    %v527 = vld [vmem:[#allocation9 + $0x58] sm:$0xff]
    %v528 = vld [vmem:[#allocation9 + $0x60] sm:$0xff]
    %v529 = vld [vmem:[#allocation9 + $0x68] sm:$0xff]
    %v530 = vld [vmem:[#allocation9 + $0x70] sm:$0xff]
    %v531 = vld [vmem:[#allocation9 + $0x78] sm:$0xff]
    %v532 = vld [vmem:[#allocation9 + $0x80] sm:$0xff]
    %v533 = vld [vmem:[#allocation9 + $0x88] sm:$0xff]
    %v534 = vld [vmem:[#allocation9 + $0x90] sm:$0xff]
    %v535 = vld [vmem:[#allocation9 + $0x98] sm:$0xff]
    %v536 = vld [vmem:[#allocation9 + $0xa0] sm:$0xff]
    %v537 = vld [vmem:[#allocation9 + $0xa8] sm:$0xff]
    %v538 = vld [vmem:[#allocation9 + $0xb0] sm:$0xff]
    %v539 = vld [vmem:[#allocation9 + $0xb8] sm:$0xff]
    %v540 = vld [vmem:[#allocation9 + $0xc0] sm:$0xff]
    %v541 = vld [vmem:[#allocation9 + $0xc8] sm:$0xff]
    %v542 = vld [vmem:[#allocation9 + $0xd0] sm:$0xff]
    %v543 = vld [vmem:[#allocation9 + $0xd8] sm:$0xff]
    %v544 = vld [vmem:[#allocation9 + $0xe0] sm:$0xff]
    %v545 = vld [vmem:[#allocation9 + $0xe8] sm:$0xff]
    %v546 = vld [vmem:[#allocation9 + $0xf0] sm:$0xff]
    %v547 = vld [vmem:[#allocation9 + $0xf8] sm:$0xff]
    %v548 = vld [vmem:[#allocation9 + $0x100] sm:$0xff]
    %v549 = vld [vmem:[#allocation9 + $0x108] sm:$0xff]
    %v550 = vld [vmem:[#allocation9 + $0x110] sm:$0xff]
    %v551 = vld [vmem:[#allocation9 + $0x118] sm:$0xff]
    %v552 = vld [vmem:[#allocation9 + $0x120] sm:$0xff]
    %v553 = vld [vmem:[#allocation9 + $0x128] sm:$0xff]
    %v554 = vld [vmem:[#allocation9 + $0x130] sm:$0xff]
    %v555 = vld [vmem:[#allocation9 + $0x138] sm:$0xff]
    %v556 = vld [vmem:[#allocation9 + $0x140] sm:$0xff]
    %v557 = vld [vmem:[#allocation9 + $0x148] sm:$0xff]
    %v558 = vld [vmem:[#allocation9 + $0x150] sm:$0xff]
    %v559 = vld [vmem:[#allocation9 + $0x158] sm:$0xff]
    %v560 = vld [vmem:[#allocation9 + $0x160] sm:$0xff]
    %v561 = vld [vmem:[#allocation9 + $0x168] sm:$0xff]
    %v562 = vld [vmem:[#allocation9 + $0x170] sm:$0xff]
    %v563 = vld [vmem:[#allocation9 + $0x178] sm:$0xff]
    %v564 = vld [vmem:[#allocation9 + $0x180] sm:$0xff]
    %v565 = vld [vmem:[#allocation9 + $0x188] sm:$0xff]
    %v566 = vld [vmem:[#allocation9 + $0x190] sm:$0xff]
    %v567 = vld [vmem:[#allocation9 + $0x198] sm:$0xff]
    %v568 = vld [vmem:[#allocation9 + $0x1a0] sm:$0xff]
    %v569 = vld [vmem:[#allocation9 + $0x1a8] sm:$0xff]
    %v570 = vld [vmem:[#allocation9 + $0x1b0] sm:$0xff]
    %v571 = vld [vmem:[#allocation9 + $0x1b8] sm:$0xff]
    %v572 = vld [vmem:[#allocation9 + $0x1c0] sm:$0xff]
    %v573 = vld [vmem:[#allocation9 + $0x1c8] sm:$0xff]
    %v574 = vld [vmem:[#allocation9 + $0x1d0] sm:$0xff]
    %v575 = vld [vmem:[#allocation9 + $0x1d8] sm:$0xff]
    %v576 = vld [vmem:[#allocation9 + $0x1e0] sm:$0xff]
    %v577 = vld [vmem:[#allocation9 + $0x1e8] sm:$0xff]
    %v578 = vld [vmem:[#allocation9 + $0x1f0] sm:$0xff]
    %v579 = vld [vmem:[#allocation9 + $0x1f8] sm:$0xff]
    %v580 = vld [vmem:[#allocation9 + $0x200] sm:$0xff]
    %v581 = vld [vmem:[#allocation9 + $0x208] sm:$0xff]
    %v582 = vld [vmem:[#allocation9 + $0x210] sm:$0xff]
    %v583 = vld [vmem:[#allocation9 + $0x218] sm:$0xff]
    %v584 = vld [vmem:[#allocation9 + $0x220] sm:$0xff]
    %v585 = vld [vmem:[#allocation9 + $0x228] sm:$0xff]
    %v586 = vld [vmem:[#allocation9 + $0x230] sm:$0xff]
    %v587 = vld [vmem:[#allocation9 + $0x238] sm:$0xff]
    %v588 = vld [vmem:[#allocation9 + $0x240] sm:$0xff]
    %v589 = vld [vmem:[#allocation9 + $0x248] sm:$0xff]
    %v590 = vld [vmem:[#allocation9 + $0x250] sm:$0xff]
    %v591 = vld [vmem:[#allocation9 + $0x258] sm:$0xff]
    %v592 = vld [vmem:[#allocation9 + $0x260] sm:$0xff]
    %v593 = vld [vmem:[#allocation9 + $0x268] sm:$0xff]
    %v594 = vld [vmem:[#allocation9 + $0x270] sm:$0xff]
    %v595 = vld [vmem:[#allocation9 + $0x278] sm:$0xff]
    %v596 = vld [vmem:[#allocation9 + $0x280] sm:$0xff]
    %v597 = vld [vmem:[#allocation9 + $0x288] sm:$0xff]
    %v598 = vld [vmem:[#allocation9 + $0x290] sm:$0xff]
    %v599 = vld [vmem:[#allocation9 + $0x298] sm:$0xff]
    %v600 = vld [vmem:[#allocation9 + $0x2a0] sm:$0xff]
    %v601 = vld [vmem:[#allocation9 + $0x2a8] sm:$0xff]
    %v602 = vld [vmem:[#allocation9 + $0x2b0] sm:$0xff]
    %v603 = vld [vmem:[#allocation9 + $0x2b8] sm:$0xff]
    %v604 = vld [vmem:[#allocation9 + $0x2c0] sm:$0xff]
    %v605 = vld [vmem:[#allocation9 + $0x2c8] sm:$0xff]
    %v606 = vld [vmem:[#allocation9 + $0x2d0] sm:$0xff]
    %v607 = vld [vmem:[#allocation9 + $0x2d8] sm:$0xff]
    %v608 = vld [vmem:[#allocation9 + $0x2e0] sm:$0xff]
    %v609 = vld [vmem:[#allocation9 + $0x2e8] sm:$0xff]
    %v610 = vld [vmem:[#allocation9 + $0x2f0] sm:$0xff]
    %v611 = vld [vmem:[#allocation9 + $0x2f8] sm:$0xff]
    %v612 = vld [vmem:[#allocation9 + $0x300] sm:$0xff]
    %v613 = vld [vmem:[#allocation9 + $0x308] sm:$0xff]
    %v614 = vld [vmem:[#allocation9 + $0x310] sm:$0xff]
    %v615 = vld [vmem:[#allocation9 + $0x318] sm:$0xff]
    %v616 = vld [vmem:[#allocation9 + $0x320] sm:$0xff]
    %v617 = vld [vmem:[#allocation9 + $0x328] sm:$0xff]
    %v618 = vld [vmem:[#allocation9 + $0x330] sm:$0xff]
    %v619 = vld [vmem:[#allocation9 + $0x338] sm:$0xff]
    %v620 = vld [vmem:[#allocation9 + $0x340] sm:$0xff]
    %v621 = vld [vmem:[#allocation9 + $0x348] sm:$0xff]
    %v622 = vld [vmem:[#allocation9 + $0x350] sm:$0xff]
    %v623 = vld [vmem:[#allocation9 + $0x358] sm:$0xff]
    %v624 = vld [vmem:[#allocation9 + $0x360] sm:$0xff]
    %v625 = vld [vmem:[#allocation9 + $0x368] sm:$0xff]
    %v626 = vld [vmem:[#allocation9 + $0x370] sm:$0xff]
    %v627 = vld [vmem:[#allocation9 + $0x378] sm:$0xff]
    %v628 = vld [vmem:[#allocation9 + $0x380] sm:$0xff]
    %v629 = vld [vmem:[#allocation9 + $0x388] sm:$0xff]
    %v630 = vld [vmem:[#allocation9 + $0x390] sm:$0xff]
    %v631 = vld [vmem:[#allocation9 + $0x398] sm:$0xff]
    %v632 = vld [vmem:[#allocation9 + $0x3a0] sm:$0xff]
    %v633 = vld [vmem:[#allocation9 + $0x3a8] sm:$0xff]
    %v634 = vld [vmem:[#allocation9 + $0x3b0] sm:$0xff]
    %v635 = vld [vmem:[#allocation9 + $0x3b8] sm:$0xff]
    %v636 = vld [vmem:[#allocation9 + $0x3c0] sm:$0xff]
    %v637 = vld [vmem:[#allocation9 + $0x3c8] sm:$0xff]
    %v638 = vld [vmem:[#allocation9 + $0x3d0] sm:$0xff]
    %v639 = vld [vmem:[#allocation9 + $0x3d8] sm:$0xff]
    %v640 = vld [vmem:[#allocation9 + $0x3e0] sm:$0xff]
    %v641 = vld [vmem:[#allocation9 + $0x3e8] sm:$0xff]
    %v642 = vld [vmem:[#allocation9 + $0x3f0] sm:$0xff]
    %v643 = vld [vmem:[#allocation9 + $0x3f8] sm:$0xff]
    %v644 = vld [vmem:[%s5] sm:$0xff]
    loop: start=0, step=1, limit=3
    $region46: #{tpu_custom_call.1} parent=1 // loop_pre_header
      _
    $region47: #{tpu_custom_call.1} parent=1 // loop_header
      %s646 = sphi 0, %s650
      %p647 = scmp.ge.s32.totalorder %s646, 3
    $region48: #{tpu_custom_call.1} parent=1 // loop_header_branch
      %649 = sbr.rel (%p647) target = $region52
    $region49: #{tpu_custom_call.1} parent=1 // loop_body
      %s651 = smul.u32 %s646, 8
      %s652 = sld [smem:[#allocation4 + %s651]]
      %s653 = sshra.s32 %s652, 3
      %s654 = sand.u32 %s652, 7
      %s655 = sshra.s32 %s652, 3
      %s656 = sand.u32 %s652, 7
      %s657 = smul.u32 %s653, 2
      %s658 = smul.u32 %s657, 8
      %s659 = sadd.s32 %s658, %s656
      %s660 = scalar_lea.vmem [#allocation11], %s659
      %v661 = vld [vmem:[%s660] ss:$8 sm:$0x3]
      %v662 = vlaneseq
      %vm663 = vcmp.ge.s32.totalorder %v662, 0
      %vm664 = vcmp.lt.s32.totalorder %v662, 256
      %vm665 = vmand %vm663, %vm664
      %666 = vst.msk [vmem:[#allocation3] ss:$8 sm:$0x3] %vm665, %v661
      %667 = vst.msk [vmem:[#allocation3] ss:$8 sm:$0x0] %vm665, %v661
      %s668 = sadd.s32 %s651, 1
      %s669 = sld [smem:[#allocation4 + %s668]]
      %s670 = sshra.s32 %s669, 3
      %s671 = sand.u32 %s669, 7
      %s672 = sshra.s32 %s669, 3
      %s673 = sand.u32 %s669, 7
      %s674 = smul.u32 %s670, 2
      %s675 = smul.u32 %s674, 8
      %s676 = sadd.s32 %s675, %s673
      %s677 = scalar_lea.vmem [#allocation11], %s676
      %v678 = vld [vmem:[%s677] ss:$8 sm:$0x3]
      %s679 = scalar_lea.vmem [#allocation3], 1
      %680 = vst.msk [vmem:[%s679] ss:$8 sm:$0x3] %vm665, %v678
      %681 = vst.msk [vmem:[%s679] ss:$8 sm:$0x0] %vm665, %v678
      %s682 = sadd.s32 %s651, 2
      %s683 = sld [smem:[#allocation4 + %s682]]
      %s684 = sshra.s32 %s683, 3
      %s685 = sand.u32 %s683, 7
      %s686 = sshra.s32 %s683, 3
      %s687 = sand.u32 %s683, 7
      %s688 = smul.u32 %s684, 2
      %s689 = smul.u32 %s688, 8
      %s690 = sadd.s32 %s689, %s687
      %s691 = scalar_lea.vmem [#allocation11], %s690
      %v692 = vld [vmem:[%s691] ss:$8 sm:$0x3]
      %s693 = scalar_lea.vmem [#allocation3], 2
      %694 = vst.msk [vmem:[%s693] ss:$8 sm:$0x3] %vm665, %v692
      %695 = vst.msk [vmem:[%s693] ss:$8 sm:$0x0] %vm665, %v692
      %s696 = sadd.s32 %s651, 3
      %s697 = sld [smem:[#allocation4 + %s696]]
      %s698 = sshra.s32 %s697, 3
      %s699 = sand.u32 %s697, 7
      %s700 = sshra.s32 %s697, 3
      %s701 = sand.u32 %s697, 7
      %s702 = smul.u32 %s698, 2
      %s703 = smul.u32 %s702, 8
      %s704 = sadd.s32 %s703, %s701
      %s705 = scalar_lea.vmem [#allocation11], %s704
      %v706 = vld [vmem:[%s705] ss:$8 sm:$0x3]
      %s707 = scalar_lea.vmem [#allocation3], 3
      %708 = vst.msk [vmem:[%s707] ss:$8 sm:$0x3] %vm665, %v706
      %709 = vst.msk [vmem:[%s707] ss:$8 sm:$0x0] %vm665, %v706
      %s710 = sadd.s32 %s651, 4
      %s711 = sld [smem:[#allocation4 + %s710]]
      %s712 = sshra.s32 %s711, 3
      %s713 = sand.u32 %s711, 7
      %s714 = sshra.s32 %s711, 3
      %s715 = sand.u32 %s711, 7
      %s716 = smul.u32 %s712, 2
      %s717 = smul.u32 %s716, 8
      %s718 = sadd.s32 %s717, %s715
      %s719 = scalar_lea.vmem [#allocation11], %s718
      %v720 = vld [vmem:[%s719] ss:$8 sm:$0x3]
      %s721 = scalar_lea.vmem [#allocation3], 4
      %722 = vst.msk [vmem:[%s721] ss:$8 sm:$0x3] %vm665, %v720
      %723 = vst.msk [vmem:[%s721] ss:$8 sm:$0x0] %vm665, %v720
      %s724 = sadd.s32 %s651, 5
      %s725 = sld [smem:[#allocation4 + %s724]]
      %s726 = sshra.s32 %s725, 3
      %s727 = sand.u32 %s725, 7
      %s728 = sshra.s32 %s725, 3
      %s729 = sand.u32 %s725, 7
      %s730 = smul.u32 %s726, 2
      %s731 = smul.u32 %s730, 8
      %s732 = sadd.s32 %s731, %s729
      %s733 = scalar_lea.vmem [#allocation11], %s732
      %v734 = vld [vmem:[%s733] ss:$8 sm:$0x3]
      %s735 = scalar_lea.vmem [#allocation3], 5
      %736 = vst.msk [vmem:[%s735] ss:$8 sm:$0x3] %vm665, %v734
      %737 = vst.msk [vmem:[%s735] ss:$8 sm:$0x0] %vm665, %v734
      %s738 = sadd.s32 %s651, 6
      %s739 = sld [smem:[#allocation4 + %s738]]
      %s740 = sshra.s32 %s739, 3
      %s741 = sand.u32 %s739, 7
      %s742 = sshra.s32 %s739, 3
      %s743 = sand.u32 %s739, 7
      %s744 = smul.u32 %s740, 2
      %s745 = smul.u32 %s744, 8
      %s746 = sadd.s32 %s745, %s743
      %s747 = scalar_lea.vmem [#allocation11], %s746
      %v748 = vld [vmem:[%s747] ss:$8 sm:$0x3]
      %s749 = scalar_lea.vmem [#allocation3], 6
      %750 = vst.msk [vmem:[%s749] ss:$8 sm:$0x3] %vm665, %v748
      %751 = vst.msk [vmem:[%s749] ss:$8 sm:$0x0] %vm665, %v748
      %s752 = sadd.s32 %s651, 7
      %s753 = sld [smem:[#allocation4 + %s752]]
      %s754 = sshra.s32 %s753, 3
      %s755 = sand.u32 %s753, 7
      %s756 = sshra.s32 %s753, 3
      %s757 = sand.u32 %s753, 7
      %s758 = smul.u32 %s754, 2
      %s759 = smul.u32 %s758, 8
      %s760 = sadd.s32 %s759, %s757
      %s761 = scalar_lea.vmem [#allocation11], %s760
      %v762 = vld [vmem:[%s761] ss:$8 sm:$0x3]
      %s763 = scalar_lea.vmem [#allocation3], 7
      %764 = vst.msk [vmem:[%s763] ss:$8 sm:$0x3] %vm665, %v762
      %765 = vst.msk [vmem:[%s763] ss:$8 sm:$0x0] %vm665, %v762
      %v766 = vld [vmem:[#allocation3] sm:$0xff]
      %v767 = vld [vmem:[#allocation3 + $0x8] sm:$0xff]
      %v769 = vlaneseq
      %v770 = vshrl.u32 %v769, 7
      %v771 = vsub.s32 0, %v770
      %v772 = vrot.slane %v644, %v771
      %v773 = vlaneseq
      %v774 = vshrl.u32 %v773, 7
      %v775 = vsub.s32 1, %v774
      %v776 = vrot.slane %v644, %v775
      %v777 = vlaneseq
      %v778 = vshrl.u32 %v777, 7
      %v779 = vsub.s32 2, %v778
      %v780 = vrot.slane %v644, %v779
      %v781 = vlaneseq
      %v782 = vshrl.u32 %v781, 7
      %v783 = vsub.s32 3, %v782
      %v784 = vrot.slane %v644, %v783
      %v785 = vlaneseq
      %v786 = vshrl.u32 %v785, 7
      %v787 = vsub.s32 4, %v786
      %v788 = vrot.slane %v644, %v787
      %v789 = vlaneseq
      %v790 = vshrl.u32 %v789, 7
      %v791 = vsub.s32 5, %v790
      %v792 = vrot.slane %v644, %v791
      %v793 = vlaneseq
      %v794 = vshrl.u32 %v793, 7
      %v795 = vsub.s32 6, %v794
      %v796 = vrot.slane %v644, %v795
      %v797 = vlaneseq
      %v798 = vshrl.u32 %v797, 7
      %v799 = vsub.s32 7, %v798
      %v800 = vrot.slane %v644, %v799
      %809 = vmatprep.subr.mxu0 %v517
      %810 = vmatpush1.msra.mxu0 %v516
      %811 = vmatprep.subr.mxu0 %v525
      %812 = vmatpush1.msra.mxu0 %v524
      %813 = vmatprep.subr.mxu0 %v533
      %814 = vmatpush1.msra.mxu0 %v532
      %815 = vmatprep.subr.mxu0 %v541
      %816 = vmatpush1.msra.mxu0 %v540
      %817 = vmatprep.subr.mxu0 %v549
      %818 = vmatpush1.msra.mxu0 %v548
      %819 = vmatprep.subr.mxu0 %v557
      %820 = vmatpush1.msra.mxu0 %v556
      %821 = vmatprep.subr.mxu0 %v565
      %822 = vmatpush1.msra.mxu0 %v564
      %823 = vmatprep.subr.mxu0 %v573
      %824 = vmatpush1.msra.mxu0 %v572
      %825 = vmatprep.subr.mxu0 %v581
      %826 = vmatpush1.msra.mxu0 %v580
      %827 = vmatprep.subr.mxu0 %v589
      %828 = vmatpush1.msra.mxu0 %v588
      %829 = vmatprep.subr.mxu0 %v597
      %830 = vmatpush1.msra.mxu0 %v596
      %831 = vmatprep.subr.mxu0 %v605
      %832 = vmatpush1.msra.mxu0 %v604
      %833 = vmatprep.subr.mxu0 %v613
      %834 = vmatpush1.msra.mxu0 %v612
      %835 = vmatprep.subr.mxu0 %v621
      %836 = vmatpush1.msra.mxu0 %v620
      %837 = vmatprep.subr.mxu0 %v629
      %838 = vmatpush1.msra.mxu0 %v628
      %839 = vmatprep.subr.mxu0 %v637
      %840 = vmatpush1.msra.mxu0 %v636
      %841 = vmatprep.subr.mxu0 0.0
      %842 = vmatpush1.msra.mxu0 0.0
      %843 = vmatprep.subr.mxu0 0.0
      %844 = vmatpush1.msra.mxu0 0.0
      %845 = vmatprep.subr.mxu0 0.0
      %846 = vmatpush1.msra.mxu0 0.0
      %847 = vmatprep.subr.mxu0 0.0
      %848 = vmatpush1.msra.mxu0 0.0
      %849 = vmatprep.subr.mxu0 0.0
      %850 = vmatpush1.msra.mxu0 0.0
      %851 = vmatprep.subr.mxu0 0.0
      %852 = vmatpush1.msra.mxu0 0.0
      %853 = vmatprep.subr.mxu0 0.0
      %854 = vmatpush1.msra.mxu0 0.0
      %855 = vmatprep.subr.mxu0 0.0
      %856 = vmatpush1.msra.mxu0 0.0
      %857 = vmatprep.subr.mxu0 0.0
      %858 = vmatpush1.msra.mxu0 0.0
      %859 = vmatprep.subr.mxu0 0.0
      %860 = vmatpush1.msra.mxu0 0.0
      %861 = vmatprep.subr.mxu0 0.0
      %862 = vmatpush1.msra.mxu0 0.0
      %863 = vmatprep.subr.mxu0 0.0
      %864 = vmatpush1.msra.mxu0 0.0
      %865 = vmatprep.subr.mxu0 0.0
      %866 = vmatpush1.msra.mxu0 0.0
      %867 = vmatprep.subr.mxu0 0.0
      %868 = vmatpush1.msra.mxu0 0.0
      %869 = vmatprep.subr.mxu0 0.0
      %870 = vmatpush1.msra.mxu0 0.0
      %871 = vmatprep.subr.mxu0 0.0
      %872 = vmatpush1.msra.mxu0 0.0
      %873 = vmatprep.mubr.f32.mxu0 0.0
      %874 = vmatmul.mubr.f32.gmra.mrb[0].mxu0 %v767
      %v875 = vpop.f32.mrb[0].mxu0
      %v876 = vadd.f32 %v772, %v875
      %v877 = vpop.f32.mrb[0].mxu0
      %v878 = vadd.f32 %v776, %v877
      %879 = vdwg.mxu0
      %880 = vmatprep.subr.mxu0 %v519
      %881 = vmatpush1.msra.mxu0 %v518
      %882 = vmatprep.subr.mxu0 %v527
      %883 = vmatpush1.msra.mxu0 %v526
      %884 = vmatprep.subr.mxu0 %v535
      %885 = vmatpush1.msra.mxu0 %v534
      %886 = vmatprep.subr.mxu0 %v543
      %887 = vmatpush1.msra.mxu0 %v542
      %888 = vmatprep.subr.mxu0 %v551
      %889 = vmatpush1.msra.mxu0 %v550
      %890 = vmatprep.subr.mxu0 %v559
      %891 = vmatpush1.msra.mxu0 %v558
      %892 = vmatprep.subr.mxu0 %v567
      %893 = vmatpush1.msra.mxu0 %v566
      %894 = vmatprep.subr.mxu0 %v575
      %895 = vmatpush1.msra.mxu0 %v574
      %896 = vmatprep.subr.mxu0 %v583
      %897 = vmatpush1.msra.mxu0 %v582
      %898 = vmatprep.subr.mxu0 %v591
      %899 = vmatpush1.msra.mxu0 %v590
      %900 = vmatprep.subr.mxu0 %v599
      %901 = vmatpush1.msra.mxu0 %v598
      %902 = vmatprep.subr.mxu0 %v607
      %903 = vmatpush1.msra.mxu0 %v606
      %904 = vmatprep.subr.mxu0 %v615
      %905 = vmatpush1.msra.mxu0 %v614
      %906 = vmatprep.subr.mxu0 %v623
      %907 = vmatpush1.msra.mxu0 %v622
      %908 = vmatprep.subr.mxu0 %v631
      %909 = vmatpush1.msra.mxu0 %v630
      %910 = vmatprep.subr.mxu0 %v639
      %911 = vmatpush1.msra.mxu0 %v638
      %912 = vmatprep.subr.mxu0 0.0
      %913 = vmatpush1.msra.mxu0 0.0
      %914 = vmatprep.subr.mxu0 0.0
      %915 = vmatpush1.msra.mxu0 0.0
      %916 = vmatprep.subr.mxu0 0.0
      %917 = vmatpush1.msra.mxu0 0.0
      %918 = vmatprep.subr.mxu0 0.0
      %919 = vmatpush1.msra.mxu0 0.0
      %920 = vmatprep.subr.mxu0 0.0
      %921 = vmatpush1.msra.mxu0 0.0
      %922 = vmatprep.subr.mxu0 0.0
      %923 = vmatpush1.msra.mxu0 0.0
      %924 = vmatprep.subr.mxu0 0.0
      %925 = vmatpush1.msra.mxu0 0.0
      %926 = vmatprep.subr.mxu0 0.0
      %927 = vmatpush1.msra.mxu0 0.0
      %928 = vmatprep.subr.mxu0 0.0
      %929 = vmatpush1.msra.mxu0 0.0
      %930 = vmatprep.subr.mxu0 0.0
      %931 = vmatpush1.msra.mxu0 0.0
      %932 = vmatprep.subr.mxu0 0.0
      %933 = vmatpush1.msra.mxu0 0.0
      %934 = vmatprep.subr.mxu0 0.0
      %935 = vmatpush1.msra.mxu0 0.0
      %936 = vmatprep.subr.mxu0 0.0
      %937 = vmatpush1.msra.mxu0 0.0
      %938 = vmatprep.subr.mxu0 0.0
      %939 = vmatpush1.msra.mxu0 0.0
      %940 = vmatprep.subr.mxu0 0.0
      %941 = vmatpush1.msra.mxu0 0.0
      %942 = vmatprep.subr.mxu0 0.0
      %943 = vmatpush1.msra.mxu0 0.0
      %944 = vmatprep.mubr.f32.mxu0 0.0
      %945 = vmatmul.mubr.f32.gmra.mrb[0].mxu0 %v767
      %v946 = vpop.f32.mrb[0].mxu0
      %v947 = vadd.f32 %v780, %v946
      %v948 = vpop.f32.mrb[0].mxu0
      %v949 = vadd.f32 %v784, %v948
      %950 = vdwg.mxu0
      %951 = vmatprep.subr.mxu0 %v521
      %952 = vmatpush1.msra.mxu0 %v520
      %953 = vmatprep.subr.mxu0 %v529
      %954 = vmatpush1.msra.mxu0 %v528
      %955 = vmatprep.subr.mxu0 %v537
      %956 = vmatpush1.msra.mxu0 %v536
      %957 = vmatprep.subr.mxu0 %v545
      %958 = vmatpush1.msra.mxu0 %v544
      %959 = vmatprep.subr.mxu0 %v553
      %960 = vmatpush1.msra.mxu0 %v552
      %961 = vmatprep.subr.mxu0 %v561
      %962 = vmatpush1.msra.mxu0 %v560
      %963 = vmatprep.subr.mxu0 %v569
      %964 = vmatpush1.msra.mxu0 %v568
      %965 = vmatprep.subr.mxu0 %v577
      %966 = vmatpush1.msra.mxu0 %v576
      %967 = vmatprep.subr.mxu0 %v585
      %968 = vmatpush1.msra.mxu0 %v584
      %969 = vmatprep.subr.mxu0 %v593
      %970 = vmatpush1.msra.mxu0 %v592
      %971 = vmatprep.subr.mxu0 %v601
      %972 = vmatpush1.msra.mxu0 %v600
      %973 = vmatprep.subr.mxu0 %v609
      %974 = vmatpush1.msra.mxu0 %v608
      %975 = vmatprep.subr.mxu0 %v617
      %976 = vmatpush1.msra.mxu0 %v616
      %977 = vmatprep.subr.mxu0 %v625
      %978 = vmatpush1.msra.mxu0 %v624
      %979 = vmatprep.subr.mxu0 %v633
      %980 = vmatpush1.msra.mxu0 %v632
      %981 = vmatprep.subr.mxu0 %v641
      %982 = vmatpush1.msra.mxu0 %v640
      %983 = vmatprep.subr.mxu0 0.0
      %984 = vmatpush1.msra.mxu0 0.0
      %985 = vmatprep.subr.mxu0 0.0
      %986 = vmatpush1.msra.mxu0 0.0
      %987 = vmatprep.subr.mxu0 0.0
      %988 = vmatpush1.msra.mxu0 0.0
      %989 = vmatprep.subr.mxu0 0.0
      %990 = vmatpush1.msra.mxu0 0.0
      %991 = vmatprep.subr.mxu0 0.0
      %992 = vmatpush1.msra.mxu0 0.0
      %993 = vmatprep.subr.mxu0 0.0
      %994 = vmatpush1.msra.mxu0 0.0
      %995 = vmatprep.subr.mxu0 0.0
      %996 = vmatpush1.msra.mxu0 0.0
      %997 = vmatprep.subr.mxu0 0.0
      %998 = vmatpush1.msra.mxu0 0.0
      %999 = vmatprep.subr.mxu0 0.0
      %1000 = vmatpush1.msra.mxu0 0.0
      %1001 = vmatprep.subr.mxu0 0.0
      %1002 = vmatpush1.msra.mxu0 0.0
      %1003 = vmatprep.subr.mxu0 0.0
      %1004 = vmatpush1.msra.mxu0 0.0
      %1005 = vmatprep.subr.mxu0 0.0
      %1006 = vmatpush1.msra.mxu0 0.0
      %1007 = vmatprep.subr.mxu0 0.0
      %1008 = vmatpush1.msra.mxu0 0.0
      %1009 = vmatprep.subr.mxu0 0.0
      %1010 = vmatpush1.msra.mxu0 0.0
      %1011 = vmatprep.subr.mxu0 0.0
      %1012 = vmatpush1.msra.mxu0 0.0
      %1013 = vmatprep.subr.mxu0 0.0
      %1014 = vmatpush1.msra.mxu0 0.0
      %1015 = vmatprep.mubr.f32.mxu0 0.0
      %1016 = vmatmul.mubr.f32.gmra.mrb[0].mxu0 %v767
      %v1017 = vpop.f32.mrb[0].mxu0
      %v1018 = vadd.f32 %v788, %v1017
      %v1019 = vpop.f32.mrb[0].mxu0
      %v1020 = vadd.f32 %v792, %v1019
      %1021 = vdwg.mxu0
      %1022 = vmatprep.subr.mxu0 %v523
      %1023 = vmatpush1.msra.mxu0 %v522
      %1024 = vmatprep.subr.mxu0 %v531
      %1025 = vmatpush1.msra.mxu0 %v530
      %1026 = vmatprep.subr.mxu0 %v539
      %1027 = vmatpush1.msra.mxu0 %v538
      %1028 = vmatprep.subr.mxu0 %v547
      %1029 = vmatpush1.msra.mxu0 %v546
      %1030 = vmatprep.subr.mxu0 %v555
      %1031 = vmatpush1.msra.mxu0 %v554
      %1032 = vmatprep.subr.mxu0 %v563
      %1033 = vmatpush1.msra.mxu0 %v562
      %1034 = vmatprep.subr.mxu0 %v571
      %1035 = vmatpush1.msra.mxu0 %v570
      %1036 = vmatprep.subr.mxu0 %v579
      %1037 = vmatpush1.msra.mxu0 %v578
      %1038 = vmatprep.subr.mxu0 %v587
      %1039 = vmatpush1.msra.mxu0 %v586
      %1040 = vmatprep.subr.mxu0 %v595
      %1041 = vmatpush1.msra.mxu0 %v594
      %1042 = vmatprep.subr.mxu0 %v603
      %1043 = vmatpush1.msra.mxu0 %v602
      %1044 = vmatprep.subr.mxu0 %v611
      %1045 = vmatpush1.msra.mxu0 %v610
      %1046 = vmatprep.subr.mxu0 %v619
      %1047 = vmatpush1.msra.mxu0 %v618
      %1048 = vmatprep.subr.mxu0 %v627
      %1049 = vmatpush1.msra.mxu0 %v626
      %1050 = vmatprep.subr.mxu0 %v635
      %1051 = vmatpush1.msra.mxu0 %v634
      %1052 = vmatprep.subr.mxu0 %v643
      %1053 = vmatpush1.msra.mxu0 %v642
      %1054 = vmatprep.subr.mxu0 0.0
      %1055 = vmatpush1.msra.mxu0 0.0
      %1056 = vmatprep.subr.mxu0 0.0
      %1057 = vmatpush1.msra.mxu0 0.0
      %1058 = vmatprep.subr.mxu0 0.0
      %1059 = vmatpush1.msra.mxu0 0.0
      %1060 = vmatprep.subr.mxu0 0.0
      %1061 = vmatpush1.msra.mxu0 0.0
      %1062 = vmatprep.subr.mxu0 0.0
      %1063 = vmatpush1.msra.mxu0 0.0
      %1064 = vmatprep.subr.mxu0 0.0
      %1065 = vmatpush1.msra.mxu0 0.0
      %1066 = vmatprep.subr.mxu0 0.0
      %1067 = vmatpush1.msra.mxu0 0.0
      %1068 = vmatprep.subr.mxu0 0.0
      %1069 = vmatpush1.msra.mxu0 0.0
      %1070 = vmatprep.subr.mxu0 0.0
      %1071 = vmatpush1.msra.mxu0 0.0
      %1072 = vmatprep.subr.mxu0 0.0
      %1073 = vmatpush1.msra.mxu0 0.0
      %1074 = vmatprep.subr.mxu0 0.0
      %1075 = vmatpush1.msra.mxu0 0.0
      %1076 = vmatprep.subr.mxu0 0.0
      %1077 = vmatpush1.msra.mxu0 0.0
      %1078 = vmatprep.subr.mxu0 0.0
      %1079 = vmatpush1.msra.mxu0 0.0
      %1080 = vmatprep.subr.mxu0 0.0
      %1081 = vmatpush1.msra.mxu0 0.0
      %1082 = vmatprep.subr.mxu0 0.0
      %1083 = vmatpush1.msra.mxu0 0.0
      %1084 = vmatprep.subr.mxu0 0.0
      %1085 = vmatpush1.msra.mxu0 0.0
      %1086 = vmatprep.mubr.f32.mxu0 0.0
      %1087 = vmatmul.mubr.f32.gmra.mrb[0].mxu0 %v767
      %v1088 = vpop.f32.mrb[0].mxu0
      %v1089 = vadd.f32 %v796, %v1088
      %v1090 = vpop.f32.mrb[0].mxu0
      %v1091 = vadd.f32 %v800, %v1090
      %1092 = vdwg.mxu0
      %s1093 = sshra.s32 %s651, 3
      %s1094 = sand.u32 %s651, 7
      %s1095 = smul.u32 %s1093, 8
      %s1096 = smul.addr %s1095, 8
      %s1097 = scalar_lea.vmem [#allocation2], %s1096
      %v1098 = vld [vmem:[%s1097] sm:$0xff]
      %v1099 = vld [vmem:[%s1097 + $0x8] sm:$0xff]
      %v1100 = vld [vmem:[%s1097 + $0x10] sm:$0xff]
      %v1101 = vld [vmem:[%s1097 + $0x18] sm:$0xff]
      %v1102 = vld [vmem:[%s1097 + $0x20] sm:$0xff]
      %v1103 = vld [vmem:[%s1097 + $0x28] sm:$0xff]
      %v1104 = vld [vmem:[%s1097 + $0x30] sm:$0xff]
      %v1105 = vld [vmem:[%s1097 + $0x38] sm:$0xff]
      %v1106 = vadd.f32 %v1098, %v876
      %v1107 = vadd.f32 %v1099, %v878
      %v1108 = vadd.f32 %v1100, %v947
      %v1109 = vadd.f32 %v1101, %v949
      %v1110 = vadd.f32 %v1102, %v1018
      %v1111 = vadd.f32 %v1103, %v1020
      %v1112 = vadd.f32 %v1104, %v1089
      %v1113 = vadd.f32 %v1105, %v1091
      %v1114 = vxor.u32 %v1106, 2147483648
      %v1115 = vxor.u32 %v1107, 2147483648
      %v1116 = vxor.u32 %v1108, 2147483648
      %v1117 = vxor.u32 %v1109, 2147483648
      %v1118 = vxor.u32 %v1110, 2147483648
      %v1119 = vxor.u32 %v1111, 2147483648
      %v1120 = vmul.f32 %v1114, 1.442695
      %v1121 = vpow.pop %v1120
      %v1122 = vmul.f32 %v1115, 1.442695
      %v1123 = vpow.pop %v1122
      %v1124 = vmul.f32 %v1116, 1.442695
      %v1125 = vpow.pop %v1124
      %v1126 = vmul.f32 %v1117, 1.442695
      %v1127 = vpow.pop %v1126
      %v1128 = vmul.f32 %v1118, 1.442695
      %v1129 = vpow.pop %v1128
      %v1130 = vmul.f32 %v1119, 1.442695
      %v1131 = vpow.pop %v1130
      %v1132 = vadd.f32 %v1121, 1.0
      %v1133 = vadd.f32 %v1123, 1.0
      %v1134 = vadd.f32 %v1125, 1.0
      %v1135 = vadd.f32 %v1127, 1.0
      %v1136 = vadd.f32 %v1129, 1.0
      %v1137 = vadd.f32 %v1131, 1.0
      %v1138 = vrcp.pop %v1132
      %v1139 = vmul.f32 1.0, %v1138
      %v1140 = vrcp.pop %v1133
      %v1141 = vmul.f32 1.0, %v1140
      %v1142 = vrcp.pop %v1134
      %v1143 = vmul.f32 1.0, %v1142
      %v1144 = vrcp.pop %v1135
      %v1145 = vmul.f32 1.0, %v1144
      %v1146 = vrcp.pop %v1136
      %v1147 = vmul.f32 1.0, %v1146
      %v1148 = vrcp.pop %v1137
      %v1149 = vmul.f32 1.0, %v1148
      %v1150 = vtanh.pop %v1112
      %v1151 = vtanh.pop %v1113
      %v1152 = vmul.f32 %v1139, %v1150
      %v1153 = vmul.f32 %v1143, %v766
      %v1154 = vadd.f32 %v1152, %v1153
      %v1155 = vtanh.pop %v1154
      %v1156 = vmul.f32 %v1141, %v1155
      %v1157 = vmul.f32 %v1145, %v1151
      %v1158 = vmul.f32 %v1149, %v766
      %v1159 = vadd.f32 %v1157, %v1158
      %v1160 = vtanh.pop %v1159
      %v1161 = vmul.f32 %v1147, %v1160
      %s1162 = scalar_lea.vmem %s6, %s651
      %v1163 = vld [vmem:[%s1162] sm:$0xff]
      %s1164 = scalar_lea.vmem %s7, %s651
      %v1165 = vld [vmem:[%s1164] sm:$0xff]
      %1167 = vset.pattern.permute.xlu0 0
      %1168 = vperm.xlu0 %1167, %v1163
      %v1169 = vpop.permute.xlu0 %1168
      %v1171 = vmul.f32 %v1169, %v1159
      %1173 = vset.pattern.permute.xlu0 0
      %1174 = vperm.xlu0 %1173, %v1165
      %v1175 = vpop.permute.xlu0 %1174
      %v1177 = vmul.f32 %v1175, %v1154
      %v1178 = vadd.f32 %v1171, %v1177
      %v1179 = vmul.f32 %v1169, %v1161
      %v1180 = vmul.f32 %v1175, %v1156
      %v1181 = vadd.f32 %v1179, %v1180
      %s1182 = smul.u32 %s1093, 2
      %s1183 = smul.addr %s1182, 8
      %s1184 = scalar_lea.vmem [#allocation11], %s1183
      %1185 = vst [vmem:[%s1184] sm:$0xff] %v1178
      %1186 = vst [vmem:[%s1184 + $0x8] sm:$0xff] %v1181
    $region50: #{tpu_custom_call.1} parent=1 // loop_footer
      %s650 = sadd.s32 1, %s646
    $region51: #{tpu_custom_call.1} parent=1 // loop_footer_branch
      %645 = sbr.rel target = $region47
    $region52: #{tpu_custom_call.1} parent=1 // loop_exit
      _
    // Predicated region
    $region53: #{tpu_custom_call.1} parent=1 // pred_check
      _
    $region54: #{tpu_custom_call.1} parent=1 // pred_check_branch
      %1188 = sbr.rel (0) target = $region56
    $region55: #{tpu_custom_call.1} parent=1 // pred_region
      %s1190 = ssub.s32 1024, 1024
      %1191 = vsyncadd [#allocation6], %s1190
      %s1192 = sshll.u32 [#allocation11], 4
      %s1193 = int_to_ptr.vmem [resolvable:$true] %s1192
      %1198 = dma.vmem_to_hbm [thread:$0]  %s1193, 1024, %s8, [#allocation6], 256, 256, 16
    $region56: #{tpu_custom_call.1} parent=1 // pred_fallthru
      _
    // Predicated region
    $region57: #{tpu_custom_call.1} parent=1 // pred_check
      _
    $region58: #{tpu_custom_call.1} parent=1 // pred_check_branch
      %1200 = sbr.rel (0) target = $region60
    $region59: #{tpu_custom_call.1} parent=1 // pred_region
      %1201 = dma.done [#allocation6], 1024
    $region60: #{tpu_custom_call.1} parent=1 // pred_fallthru
      _
    %1202 = vsyncpa [#allocation5], 1
    %1203 = vsyncpa [#allocation10], 1
    %1204 = vsyncpa [#allocation6], 1
    %1205 = vsyncpa [#allocation7], 1

</llo_original>
